<compile_context>
chip_gen: v7x
topology: tpu7x:2x2x1
jax: 0.10.0
libtpu: 0.0.40
codegen_flags: <defaults>
</compile_context>

<pallas_src>
import math
from functools import partial

import jax
import jax.numpy as jnp
from jax import lax
from jax.experimental import pallas as pl
from jax.experimental.pallas import tpu as pltpu

NEG_INF = -1e9       # causal-mask fill; max(X - tau, 0)^2 clamps these to exactly 0
BISECT_ITERS = 24    # bracket width < 1  ->  2^-24 is below fp32 resolution at tau scale


def _sparse_mha_kernel(q_ref, k_ref, vc_ref, woT_ref, bo_ref,   # inputs
                       y_ref, wavg_ref,                          # outputs
                       s_ref, red_ref,                           # scratch
                       *, num_heads, tq, nq, seq_len, n_iter):
    qi = pl.program_id(1)          # query-tile index
    h = pl.program_id(2)           # head index (grid reduction axis)

    # weights_avg block index is constant across h -> VMEM-resident accumulator.
    @pl.when(h == 0)
    def _():
        wavg_ref[...] = jnp.zeros(wavg_ref.shape, wavg_ref.dtype)

    qh = q_ref[...]                # (tq, dk); pre-scaled by 0.5/sqrt(dk) in the wrapper
    row_g = lax.broadcasted_iota(jnp.int32, (tq, tq), 0) + qi * tq
    col_i = lax.broadcasted_iota(jnp.int32, (tq, tq), 1)

    # ---- scores X = 0.5 * scores for the causally-live kv chunks only --------------
    # Dead chunks (kv > qi) are skipped at runtime by pl.when; all slices are static.
    red_ref[...] = jnp.full((tq, 1), -1e30, jnp.float32)          # running row max
    for kv in range(nq):
        @pl.when(kv <= qi)
        def _(kv=kv):
            kc = k_ref[kv * tq:(kv + 1) * tq, :]                  # (tq, dk)
            xc = lax.dot_general(qh, kc, (((1,), (1,)), ((), ())),
                                 preferred_element_type=jnp.float32)   # (tq, tq)
            xc = jnp.where(col_i + kv * tq <= row_g, xc, NEG_INF)      # causal mask
            s_ref[kv] = xc
            red_ref[...] = jnp.maximum(red_ref[...],
                                       jnp.max(xc, axis=-1, keepdims=True))
    max_val = red_ref[...]

    # ---- entmax-1.5 threshold tau via bisection over the live prefix ---------------
    tau_lo = max_val - 1.0                                        # f(tau_lo) >= 0
    dm0 = jnp.float32(1.0 - (1.0 / seq_len) ** 0.5)               # bracket width < 1

    def bisect_body(_, carry):
        tau_lo, dm = carry
        dm = dm * 0.5
        tau_m = tau_lo + dm
        red_ref[...] = jnp.zeros((tq, 1), jnp.float32)
        for kv in range(nq):                                      # dead chunks skipped
            @pl.when(kv <= qi)
            def _(kv=kv):
                p = jnp.maximum(s_ref[kv] - tau_m, 0.0)
                red_ref[...] += jnp.sum(p * p, axis=-1, keepdims=True)
        tau_lo = jnp.where(red_ref[...] >= 1.0, tau_m, tau_lo)
        return tau_lo, dm

    tau_star, _ = lax.fori_loop(0, n_iter, bisect_body, (tau_lo, dm0))

    # ---- final p at tau_star: one pass for the denominator, one to accumulate ------
    red_ref[...] = jnp.zeros((tq, 1), jnp.float32)
    for kv in range(nq):
        @pl.when(kv <= qi)
        def _(kv=kv):
            p = jnp.maximum(s_ref[kv] - tau_star, 0.0)
            red_ref[...] += jnp.sum(p * p, axis=-1, keepdims=True)
    inv_denom = pl.reciprocal(red_ref[...], approx=True)          # EUP slot

    for kv in range(nq):
        @pl.when(kv <= qi)
        def _(kv=kv):
            p = jnp.maximum(s_ref[kv] - tau_star, 0.0)
            wavg_ref[:, kv * tq:(kv + 1) * tq] += (p * p) * inv_denom

    # ---- epilogue on the last head: head mean, V_combined matmul, W_O --------------
    @pl.when(h == num_heads - 1)
    def _():
        w_avg = wavg_ref[...] * jnp.float32(1.0 / num_heads)      # weights.mean(dim=1)
        wavg_ref[...] = w_avg.astype(wavg_ref.dtype)
        out = jnp.dot(w_avg, vc_ref[...], preferred_element_type=jnp.float32)  # (tq, dk)
        y = jnp.dot(out, woT_ref[...], preferred_element_type=jnp.float32) + bo_ref[...]
        y_ref[...] = y.astype(y_ref.dtype)


def _pick_tq(T, dk, vmem_budget_bytes):
    """Largest query tile whose per-step working set fits the VMEM budget."""
    cands = [c for c in (512, 256, 128, 64, 32, 16, 8) if c <= T and T % c == 0]
    for cand in cands:
        # s_ref + ~2x weights_avg block + k/v_comb blocks (f32)
        approx = 4 * (3 * cand * T + 4 * T * dk + 8 * cand * dk)
        if approx <= vmem_budget_bytes:
            return cand
    return cands[-1] if cands else T


def sparse_multihead_attention(x, params, num_heads, tq=None, n_iter=BISECT_ITERS,
                               matmul_dtype=None):
    B, T, D = x.shape
    H = num_heads
    dk = D // H
    assert D % H == 0

    try:
        vmem_cap = int(pltpu.get_tpu_info().vmem_capacity_bytes)
    except Exception:
        vmem_cap = 64 * 1024 * 1024          # conservative (v7x-sized) fallback
    if tq is None:
        tq = _pick_tq(T, dk, int(vmem_cap * 0.5))
    assert T % tq == 0
    nq = T // tq

    # (alpha - 1) = 0.5 of entmax-1.5 folded together with 1/sqrt(dk) into Q.
    scale = 0.5 / math.sqrt(dk)

    # Projections hoisted out of the kernel: one full-D XLA matmul each (biases folded).
    q = (x @ params["wq"].T + params["bq"]) * scale
    k = x @ params["wk"].T + params["bk"]
    v = x @ params["wv"].T + params["bv"]
    q = q.reshape(B, T, H, dk).transpose(0, 2, 1, 3)              # (B, H, T, dk)
    k = k.reshape(B, T, H, dk).transpose(0, 2, 1, 3)              # (B, H, T, dk)
    v_comb = v.reshape(B, T, H, dk).mean(axis=2)                  # (B, T, dk) = V.mean(dim=1)
    if matmul_dtype is not None:                                  # e.g. bf16 on v6e/v7x
        q = q.astype(matmul_dtype)
        k = k.astype(matmul_dtype)

    woT = params["wo"].T                                          # (dk, D)
    bo2 = params["bo"].reshape(1, D)

    kernel = partial(_sparse_mha_kernel, num_heads=H, tq=tq, nq=nq,
                     seq_len=T, n_iter=n_iter)

    grid_spec = pltpu.PrefetchScalarGridSpec(
        num_scalar_prefetch=0,
        grid=(B, nq, H),                                          # heads = reduction, innermost
        in_specs=[
            pl.BlockSpec((None, None, tq, dk), lambda b, qb, h: (b, h, qb, 0)),  # Q (scaled)
            pl.BlockSpec((None, None, T, dk), lambda b, qb, h: (b, h, 0, 0)),    # K per head
            pl.BlockSpec((None, T, dk), lambda b, qb, h: (b, 0, 0)),             # V_combined
            pl.BlockSpec((dk, D), lambda b, qb, h: (0, 0)),                      # W_O^T
            pl.BlockSpec((1, D), lambda b, qb, h: (0, 0)),                       # b_O
        ],
        out_specs=[
            pl.BlockSpec((None, tq, D), lambda b, qb, h: (b, qb, 0)),            # y
            pl.BlockSpec((None, tq, T), lambda b, qb, h: (b, qb, 0)),            # weights_avg
        ],
        scratch_shapes=[
            pltpu.VMEM((nq, tq, tq), jnp.float32),   # per-head scaled scores, chunked by kv
            pltpu.VMEM((tq, 1), jnp.float32),        # row-wise reduction buffer (max / f / denom)
        ],
    )

    vmem_limit = min(int(vmem_cap * 0.85), 110 * 1024 * 1024)
    return pl.pallas_call(
        kernel,
        out_shape=(jax.ShapeDtypeStruct((B, T, D), x.dtype),
                   jax.ShapeDtypeStruct((B, T, T), jnp.float32)),
        grid_spec=grid_spec,
        compiler_params=pltpu.CompilerParams(
            dimension_semantics=("parallel", "parallel", "arbitrary"),
            vmem_limit_bytes=vmem_limit),
    )(q, k, v_comb, woT, bo2)


# ----------------------- deterministic parameter init -----------------------

def init_params(key, d_model, num_heads):
    dk = d_model // num_heads
    ks = jax.random.split(key, 8)

    def linear(kw, kb, fan_in, fan_out):
        bound = 1.0 / math.sqrt(fan_in)
        w = jax.random.uniform(kw, (fan_out, fan_in), jnp.float32, -bound, bound)
        b = jax.random.uniform(kb, (fan_out,), jnp.float32, -bound, bound)
        return w, b

    wq, bq = linear(ks[0], ks[1], d_model, d_model)
    wk, bk = linear(ks[2], ks[3], d_model, d_model)
    wv, bv = linear(ks[4], ks[5], d_model, d_model)
    wo, bo = linear(ks[6], ks[7], dk, d_model)
    return dict(wq=wq, bq=bq, wk=wk, bk=bk, wv=wv, bv=bv, wo=wo, bo=bo)


# ----------------------- pure-JAX reference (exact, sort-based entmax15) -----------------------

def _entmax15_exact_ref(scores):
    X = scores * 0.5
    X = X - jnp.max(X, axis=-1, keepdims=True)
    Xsrt = -jnp.sort(-X, axis=-1)
    d = scores.shape[-1]
    rho = jnp.arange(1, d + 1, dtype=X.dtype)
    mean = jnp.cumsum(Xsrt, axis=-1) / rho
    mean_sq = jnp.cumsum(Xsrt ** 2, axis=-1) / rho
    ss = rho * (mean_sq - mean ** 2)
    delta = jnp.maximum((1.0 - ss) / rho, 0.0)
    tau = mean - jnp.sqrt(delta)
    support = jnp.sum((tau <= Xsrt).astype(jnp.int32), axis=-1, keepdims=True)
    tau_star = jnp.take_along_axis(tau, support - 1, axis=-1)
    return jnp.maximum(X - tau_star, 0.0) ** 2


def reference_forward(x, params, num_heads):
    B, T, D = x.shape
    dk = D // num_heads
    q = x @ params["wq"].T + params["bq"]
    k = x @ params["wk"].T + params["bk"]
    v = x @ params["wv"].T + params["bv"]
    q = q.reshape(B, T, num_heads, dk).transpose(0, 2, 1, 3)
    k = k.reshape(B, T, num_heads, dk).transpose(0, 2, 1, 3)
    v = v.reshape(B, T, num_heads, dk).transpose(0, 2, 1, 3)
    s = jnp.einsum("bhqd,bhkd->bhqk", q, k) / math.sqrt(dk)
    mask = jnp.triu(jnp.ones((T, T), bool), k=1)
    s = jnp.where(mask[None, None], NEG_INF, s)
    w = _entmax15_exact_ref(s)
    w_avg = w.mean(axis=1)
    v_comb = v.mean(axis=1)
    out = jnp.einsum("bqk,bkd->bqd", w_avg, v_comb)
    y = out @ params["wo"].T + params["bo"]
    return y, w_avg


if __name__ == "__main__":
    # T=16 with tq=8 -> 2 kv chunks per row of query tiles, exercising the causal
    # chunk skipping, the in-chunk diagonal mask, and the multi-chunk epilogue.
    B, T, D, H = 2, 16, 32, 4      # d_model=32, num_heads=4, dk=8
    key = jax.random.PRNGKey(0)
    kx, kp = jax.random.split(key)
    x = jax.random.normal(kx, (B, T, D), jnp.float32)
    params = init_params(kp, D, H)

    y, w_avg = sparse_multihead_attention(x, params, H, tq=8)
    jax.block_until_ready((y, w_avg))

    y_ref, w_ref = reference_forward(x, params, H)
    err_y = float(jnp.max(jnp.abs(y - y_ref)))
    err_w = float(jnp.max(jnp.abs(w_avg - w_ref)))
    assert err_y < 2e-3, err_y
    assert err_w < 2e-3, err_w
    print("KERNEL_OK")
</pallas_src>

<mosaic_0001>
module attributes {stable_mosaic.version = 11 : i64} {
  func.func @_sparse_mha_kernel(%arg0: i32, %arg1: i32, %arg2: i32, %arg3: memref<1x1x8x8xf32, #tpu.memory_space<vmem>>, %arg4: memref<1x1x16x8xf32, #tpu.memory_space<vmem>>, %arg5: memref<1x16x8xf32, #tpu.memory_space<vmem>>, %arg6: memref<8x32xf32, #tpu.memory_space<vmem>>, %arg7: memref<1x32xf32, #tpu.memory_space<vmem>>, %arg8: memref<1x8x32xf32, #tpu.memory_space<vmem>>, %arg9: memref<1x8x16xf32, #tpu.memory_space<vmem>>, %arg10: memref<2x8x8xf32, #tpu.memory_space<vmem>>, %arg11: memref<8x1xf32, #tpu.memory_space<vmem>>) attributes {dimension_semantics = [#tpu.dimension_semantics<parallel>, #tpu.dimension_semantics<parallel>, #tpu.dimension_semantics<arbitrary>], iteration_bounds = array<i64: 2, 2, 4>, scalar_prefetch = 0 : i64, scratch_operands = 2 : i64, tpu.core_type = #tpu.core_type<tc>, window_params = [{transform_indices = @transform_0, window_bounds = array<i64: 1, 1, 8, 8>}, {transform_indices = @transform_1, window_bounds = array<i64: 1, 1, 16, 8>}, {transform_indices = @transform_2, window_bounds = array<i64: 1, 16, 8>}, {pipeline_mode = #tpu.pipeline_mode<synchronous>, transform_indices = @transform_3, window_bounds = array<i64: 8, 32>}, {pipeline_mode = #tpu.pipeline_mode<synchronous>, transform_indices = @transform_4, window_bounds = array<i64: 1, 32>}, {transform_indices = @transform_5, window_bounds = array<i64: 1, 8, 32>}, {transform_indices = @transform_6, window_bounds = array<i64: 1, 8, 16>}]} {
    %c0_i32 = arith.constant 0 : i32
    %0 = arith.cmpi eq, %arg2, %c0_i32 : i32
    %1 = arith.extui %0 : i1 to i32
    %c0_i32_0 = arith.constant 0 : i32
    %2 = arith.cmpi ne, %1, %c0_i32_0 : i32
    scf.if %2 {
      %cst_29 = arith.constant 0.000000e+00 : f32
      %42 = vector.broadcast %cst_29 : f32 to vector<8x16xf32>
      %c0_30 = arith.constant 0 : index
      %c0_31 = arith.constant 0 : index
      %c0_32 = arith.constant 0 : index
      %43 = vector.load %arg9[%c0_30, %c0_31, %c0_32] : memref<1x8x16xf32, #tpu.memory_space<vmem>>, vector<1x8x16xf32>
      %44 = vector.shape_cast %43 : vector<1x8x16xf32> to vector<8x16xf32>
      %45 = vector.shape_cast %42 : vector<8x16xf32> to vector<1x8x16xf32>
      tpu.vector_store %arg9[%c0_30, %c0_31, %c0_32], %45 {strides = array<i32>} : memref<1x8x16xf32, #tpu.memory_space<vmem>>, vector<1x8x16xf32>,
    } else {
    }
    %c0 = arith.constant 0 : index
    %c0_1 = arith.constant 0 : index
    %c0_2 = arith.constant 0 : index
    %c0_3 = arith.constant 0 : index
    %3 = vector.load %arg3[%c0, %c0_1, %c0_2, %c0_3] : memref<1x1x8x8xf32, #tpu.memory_space<vmem>>, vector<1x1x8x8xf32>
    %4 = vector.shape_cast %3 : vector<1x1x8x8xf32> to vector<8x8xf32>
    %5 = tpu.iota {dimensions = array<i32: 0>} : vector<8x8xi32>
    %c8_i32 = arith.constant 8 : i32
    %6 = arith.muli %arg1, %c8_i32 : i32
    %7 = vector.broadcast %6 : i32 to vector<8x8xi32>
    %8 = arith.addi %5, %7 : vector<8x8xi32>
    %9 = tpu.iota {dimensions = array<i32: 1>} : vector<8x8xi32>
    %cst = arith.constant -1.000000e+30 : f32
    %10 = vector.broadcast %cst : f32 to vector<8x1xf32>
    %c0_4 = arith.constant 0 : index
    %c0_5 = arith.constant 0 : index
    %11 = vector.load %arg11[%c0_4, %c0_5] : memref<8x1xf32, #tpu.memory_space<vmem>>, vector<8x1xf32>
    tpu.vector_store %arg11[%c0_4, %c0_5], %10 {strides = array<i32>} : memref<8x1xf32, #tpu.memory_space<vmem>>, vector<8x1xf32>,
    %c0_i32_6 = arith.constant 0 : i32
    %12 = arith.cmpi sge, %arg1, %c0_i32_6 : i32
    %13 = arith.extui %12 : i1 to i32
    %c0_i32_7 = arith.constant 0 : i32
    %14 = arith.cmpi ne, %13, %c0_i32_7 : i32
    scf.if %14 {
      %c0_29 = arith.constant 0 : index
      %c0_30 = arith.constant 0 : index
      %c0_31 = arith.constant 0 : index
      %c0_32 = arith.constant 0 : index
      %42 = vector.load %arg4[%c0_29, %c0_30, %c0_31, %c0_32] : memref<1x1x16x8xf32, #tpu.memory_space<vmem>>, vector<1x1x8x8xf32>
      %43 = vector.shape_cast %42 : vector<1x1x8x8xf32> to vector<8x8xf32>
      %cst_33 = arith.constant dense<0.000000e+00> : vector<8x8xf32>
      %44 = tpu.matmul %4, %43, %cst_33 {dimension_numbers = #tpu.dot_dimension_numbers<[1], [1], [0], [0], [0, 0, 1, 0], [], []>} : vector<8x8xf32>, vector<8x8xf32>, vector<8x8xf32> -> vector<8x8xf32>
      %c0_i32_34 = arith.constant 0 : i32
      %45 = vector.broadcast %c0_i32_34 : i32 to vector<8x8xi32>
      %46 = arith.addi %9, %45 : vector<8x8xi32>
      %47 = arith.cmpi sle, %46, %8 : vector<8x8xi32>
      %cst_35 = arith.constant -1.000000e+09 : f32
      %48 = vector.broadcast %cst_35 : f32 to vector<8x8xf32>
      %49 = arith.select %47, %44, %48 : vector<8x8xi1>, vector<8x8xf32>
      %c0_36 = arith.constant 0 : index
      %c0_37 = arith.constant 0 : index
      %c0_38 = arith.constant 0 : index
      %50 = vector.load %arg10[%c0_36, %c0_37, %c0_38] : memref<2x8x8xf32, #tpu.memory_space<vmem>>, vector<1x8x8xf32>
      %51 = vector.shape_cast %50 : vector<1x8x8xf32> to vector<8x8xf32>
      %52 = vector.shape_cast %49 : vector<8x8xf32> to vector<1x8x8xf32>
      tpu.vector_store %arg10[%c0_36, %c0_37, %c0_38], %52 {strides = array<i32>} : memref<2x8x8xf32, #tpu.memory_space<vmem>>, vector<1x8x8xf32>,
      %c0_39 = arith.constant 0 : index
      %c0_40 = arith.constant 0 : index
      %53 = vector.load %arg11[%c0_39, %c0_40] : memref<8x1xf32, #tpu.memory_space<vmem>>, vector<8x1xf32>
      %cst_41 = arith.constant dense<0xFF800000> : vector<8xf32>
      %54 = vector.multi_reduction <maximumf>, %49, %cst_41 [1] : vector<8x8xf32> to vector<8xf32>
      %55 = vector.shape_cast %54 : vector<8xf32> to vector<8x1xf32>
      %56 = arith.maximumf %53, %55 : vector<8x1xf32>
      %c0_42 = arith.constant 0 : index
      %c0_43 = arith.constant 0 : index
      %57 = vector.load %arg11[%c0_42, %c0_43] : memref<8x1xf32, #tpu.memory_space<vmem>>, vector<8x1xf32>
      tpu.vector_store %arg11[%c0_42, %c0_43], %56 {strides = array<i32>} : memref<8x1xf32, #tpu.memory_space<vmem>>, vector<8x1xf32>,
    } else {
    }
    %c1_i32 = arith.constant 1 : i32
    %15 = arith.cmpi sge, %arg1, %c1_i32 : i32
    %16 = arith.extui %15 : i1 to i32
    %c0_i32_8 = arith.constant 0 : i32
    %17 = arith.cmpi ne, %16, %c0_i32_8 : i32
    scf.if %17 {
      %c0_29 = arith.constant 0 : index
      %c0_30 = arith.constant 0 : index
      %c8 = arith.constant 8 : index
      %c0_31 = arith.constant 0 : index
      %42 = vector.load %arg4[%c0_29, %c0_30, %c8, %c0_31] : memref<1x1x16x8xf32, #tpu.memory_space<vmem>>, vector<1x1x8x8xf32>
      %43 = vector.shape_cast %42 : vector<1x1x8x8xf32> to vector<8x8xf32>
      %cst_32 = arith.constant dense<0.000000e+00> : vector<8x8xf32>
      %44 = tpu.matmul %4, %43, %cst_32 {dimension_numbers = #tpu.dot_dimension_numbers<[1], [1], [0], [0], [0, 0, 1, 0], [], []>} : vector<8x8xf32>, vector<8x8xf32>, vector<8x8xf32> -> vector<8x8xf32>
      %c8_i32_33 = arith.constant 8 : i32
      %45 = vector.broadcast %c8_i32_33 : i32 to vector<8x8xi32>
      %46 = arith.addi %9, %45 : vector<8x8xi32>
      %47 = arith.cmpi sle, %46, %8 : vector<8x8xi32>
      %cst_34 = arith.constant -1.000000e+09 : f32
      %48 = vector.broadcast %cst_34 : f32 to vector<8x8xf32>
      %49 = arith.select %47, %44, %48 : vector<8x8xi1>, vector<8x8xf32>
      %c1 = arith.constant 1 : index
      %c0_35 = arith.constant 0 : index
      %c0_36 = arith.constant 0 : index
      %50 = vector.load %arg10[%c1, %c0_35, %c0_36] : memref<2x8x8xf32, #tpu.memory_space<vmem>>, vector<1x8x8xf32>
      %51 = vector.shape_cast %50 : vector<1x8x8xf32> to vector<8x8xf32>
      %52 = vector.shape_cast %49 : vector<8x8xf32> to vector<1x8x8xf32>
      tpu.vector_store %arg10[%c1, %c0_35, %c0_36], %52 {strides = array<i32>} : memref<2x8x8xf32, #tpu.memory_space<vmem>>, vector<1x8x8xf32>,
      %c0_37 = arith.constant 0 : index
      %c0_38 = arith.constant 0 : index
      %53 = vector.load %arg11[%c0_37, %c0_38] : memref<8x1xf32, #tpu.memory_space<vmem>>, vector<8x1xf32>
      %cst_39 = arith.constant dense<0xFF800000> : vector<8xf32>
      %54 = vector.multi_reduction <maximumf>, %49, %cst_39 [1] : vector<8x8xf32> to vector<8xf32>
      %55 = vector.shape_cast %54 : vector<8xf32> to vector<8x1xf32>
      %56 = arith.maximumf %53, %55 : vector<8x1xf32>
      %c0_40 = arith.constant 0 : index
      %c0_41 = arith.constant 0 : index
      %57 = vector.load %arg11[%c0_40, %c0_41] : memref<8x1xf32, #tpu.memory_space<vmem>>, vector<8x1xf32>
      tpu.vector_store %arg11[%c0_40, %c0_41], %56 {strides = array<i32>} : memref<8x1xf32, #tpu.memory_space<vmem>>, vector<8x1xf32>,
    } else {
    }
    %c0_9 = arith.constant 0 : index
    %c0_10 = arith.constant 0 : index
    %18 = vector.load %arg11[%c0_9, %c0_10] : memref<8x1xf32, #tpu.memory_space<vmem>>, vector<8x1xf32>
    %cst_11 = arith.constant 1.000000e+00 : f32
    %19 = vector.broadcast %cst_11 : f32 to vector<8x1xf32>
    %20 = arith.subf %18, %19 : vector<8x1xf32>
    %cst_12 = arith.constant 7.500000e-01 : f32
    %c0_i32_13 = arith.constant 0 : i32
    %c24_i32 = arith.constant 24 : i32
    %21 = arith.addi %c0_i32_13, %c24_i32 : i32
    %c1_i32_14 = arith.constant 1 : i32
    %22:2 = scf.for %arg12 = %c0_i32_13 to %21 step %c1_i32_14 iter_args(%arg13 = %20, %arg14 = %cst_12) -> (vector<8x1xf32>, f32)  : i32 {
      %cst_29 = arith.constant 5.000000e-01 : f32
      %42 = arith.mulf %arg14, %cst_29 : f32
      %43 = vector.broadcast %42 : f32 to vector<8x1xf32>
      %44 = arith.addf %arg13, %43 : vector<8x1xf32>
      %cst_30 = arith.constant 0.000000e+00 : f32
      %45 = vector.broadcast %cst_30 : f32 to vector<8x1xf32>
      %c0_31 = arith.constant 0 : index
      %c0_32 = arith.constant 0 : index
      %46 = vector.load %arg11[%c0_31, %c0_32] : memref<8x1xf32, #tpu.memory_space<vmem>>, vector<8x1xf32>
      tpu.vector_store %arg11[%c0_31, %c0_32], %45 {strides = array<i32>} : memref<8x1xf32, #tpu.memory_space<vmem>>, vector<8x1xf32>,
      %c0_i32_33 = arith.constant 0 : i32
      %47 = arith.cmpi sge, %arg1, %c0_i32_33 : i32
      %48 = arith.extui %47 : i1 to i32
      %c0_i32_34 = arith.constant 0 : i32
      %49 = arith.cmpi ne, %48, %c0_i32_34 : i32
      scf.if %49 {
        %c0_40 = arith.constant 0 : index
        %c0_41 = arith.constant 0 : index
        %c0_42 = arith.constant 0 : index
        %57 = vector.load %arg10[%c0_40, %c0_41, %c0_42] : memref<2x8x8xf32, #tpu.memory_space<vmem>>, vector<1x8x8xf32>
        %58 = vector.shape_cast %57 : vector<1x8x8xf32> to vector<8x8xf32>
        %59 = vector.broadcast %44 : vector<8x1xf32> to vector<8x8xf32>
        %60 = arith.subf %58, %59 : vector<8x8xf32>
        %cst_43 = arith.constant 0.000000e+00 : f32
        %61 = vector.broadcast %cst_43 : f32 to vector<8x8xf32>
        %62 = arith.maximumf %60, %61 : vector<8x8xf32>
        %c0_44 = arith.constant 0 : index
        %c0_45 = arith.constant 0 : index
        %63 = vector.load %arg11[%c0_44, %c0_45] : memref<8x1xf32, #tpu.memory_space<vmem>>, vector<8x1xf32>
        %64 = arith.mulf %62, %62 : vector<8x8xf32>
        %cst_46 = arith.constant dense<0.000000e+00> : vector<8xf32>
        %65 = vector.multi_reduction <add>, %64, %cst_46 [1] : vector<8x8xf32> to vector<8xf32>
        %66 = vector.shape_cast %65 : vector<8xf32> to vector<8x1xf32>
        %67 = arith.addf %63, %66 : vector<8x1xf32>
        %c0_47 = arith.constant 0 : index
        %c0_48 = arith.constant 0 : index
        %68 = vector.load %arg11[%c0_47, %c0_48] : memref<8x1xf32, #tpu.memory_space<vmem>>, vector<8x1xf32>
        tpu.vector_store %arg11[%c0_47, %c0_48], %67 {strides = array<i32>} : memref<8x1xf32, #tpu.memory_space<vmem>>, vector<8x1xf32>,
      } else {
      }
      %c1_i32_35 = arith.constant 1 : i32
      %50 = arith.cmpi sge, %arg1, %c1_i32_35 : i32
      %51 = arith.extui %50 : i1 to i32
      %c0_i32_36 = arith.constant 0 : i32
      %52 = arith.cmpi ne, %51, %c0_i32_36 : i32
      scf.if %52 {
        %c1 = arith.constant 1 : index
        %c0_40 = arith.constant 0 : index
        %c0_41 = arith.constant 0 : index
        %57 = vector.load %arg10[%c1, %c0_40, %c0_41] : memref<2x8x8xf32, #tpu.memory_space<vmem>>, vector<1x8x8xf32>
        %58 = vector.shape_cast %57 : vector<1x8x8xf32> to vector<8x8xf32>
        %59 = vector.broadcast %44 : vector<8x1xf32> to vector<8x8xf32>
        %60 = arith.subf %58, %59 : vector<8x8xf32>
        %cst_42 = arith.constant 0.000000e+00 : f32
        %61 = vector.broadcast %cst_42 : f32 to vector<8x8xf32>
        %62 = arith.maximumf %60, %61 : vector<8x8xf32>
        %c0_43 = arith.constant 0 : index
        %c0_44 = arith.constant 0 : index
        %63 = vector.load %arg11[%c0_43, %c0_44] : memref<8x1xf32, #tpu.memory_space<vmem>>, vector<8x1xf32>
        %64 = arith.mulf %62, %62 : vector<8x8xf32>
        %cst_45 = arith.constant dense<0.000000e+00> : vector<8xf32>
        %65 = vector.multi_reduction <add>, %64, %cst_45 [1] : vector<8x8xf32> to vector<8xf32>
        %66 = vector.shape_cast %65 : vector<8xf32> to vector<8x1xf32>
        %67 = arith.addf %63, %66 : vector<8x1xf32>
        %c0_46 = arith.constant 0 : index
        %c0_47 = arith.constant 0 : index
        %68 = vector.load %arg11[%c0_46, %c0_47] : memref<8x1xf32, #tpu.memory_space<vmem>>, vector<8x1xf32>
        tpu.vector_store %arg11[%c0_46, %c0_47], %67 {strides = array<i32>} : memref<8x1xf32, #tpu.memory_space<vmem>>, vector<8x1xf32>,
      } else {
      }
      %c0_37 = arith.constant 0 : index
      %c0_38 = arith.constant 0 : index
      %53 = vector.load %arg11[%c0_37, %c0_38] : memref<8x1xf32, #tpu.memory_space<vmem>>, vector<8x1xf32>
      %cst_39 = arith.constant 1.000000e+00 : f32
      %54 = vector.broadcast %cst_39 : f32 to vector<8x1xf32>
      %55 = arith.cmpf oge, %53, %54 : vector<8x1xf32>
      %56 = arith.select %55, %44, %arg13 : vector<8x1xi1>, vector<8x1xf32>
      scf.yield %56, %42 : vector<8x1xf32>, f32
    }
    %cst_15 = arith.constant 0.000000e+00 : f32
    %23 = vector.broadcast %cst_15 : f32 to vector<8x1xf32>
    %c0_16 = arith.constant 0 : index
    %c0_17 = arith.constant 0 : index
    %24 = vector.load %arg11[%c0_16, %c0_17] : memref<8x1xf32, #tpu.memory_space<vmem>>, vector<8x1xf32>
    tpu.vector_store %arg11[%c0_16, %c0_17], %23 {strides = array<i32>} : memref<8x1xf32, #tpu.memory_space<vmem>>, vector<8x1xf32>,
    %c0_i32_18 = arith.constant 0 : i32
    %25 = arith.cmpi sge, %arg1, %c0_i32_18 : i32
    %26 = arith.extui %25 : i1 to i32
    %c0_i32_19 = arith.constant 0 : i32
    %27 = arith.cmpi ne, %26, %c0_i32_19 : i32
    scf.if %27 {
      %c0_29 = arith.constant 0 : index
      %c0_30 = arith.constant 0 : index
      %c0_31 = arith.constant 0 : index
      %42 = vector.load %arg10[%c0_29, %c0_30, %c0_31] : memref<2x8x8xf32, #tpu.memory_space<vmem>>, vector<1x8x8xf32>
      %43 = vector.shape_cast %42 : vector<1x8x8xf32> to vector<8x8xf32>
      %44 = vector.broadcast %22#0 : vector<8x1xf32> to vector<8x8xf32>
      %45 = arith.subf %43, %44 : vector<8x8xf32>
      %cst_32 = arith.constant 0.000000e+00 : f32
      %46 = vector.broadcast %cst_32 : f32 to vector<8x8xf32>
      %47 = arith.maximumf %45, %46 : vector<8x8xf32>
      %c0_33 = arith.constant 0 : index
      %c0_34 = arith.constant 0 : index
      %48 = vector.load %arg11[%c0_33, %c0_34] : memref<8x1xf32, #tpu.memory_space<vmem>>, vector<8x1xf32>
      %49 = arith.mulf %47, %47 : vector<8x8xf32>
      %cst_35 = arith.constant dense<0.000000e+00> : vector<8xf32>
      %50 = vector.multi_reduction <add>, %49, %cst_35 [1] : vector<8x8xf32> to vector<8xf32>
      %51 = vector.shape_cast %50 : vector<8xf32> to vector<8x1xf32>
      %52 = arith.addf %48, %51 : vector<8x1xf32>
      %c0_36 = arith.constant 0 : index
      %c0_37 = arith.constant 0 : index
      %53 = vector.load %arg11[%c0_36, %c0_37] : memref<8x1xf32, #tpu.memory_space<vmem>>, vector<8x1xf32>
      tpu.vector_store %arg11[%c0_36, %c0_37], %52 {strides = array<i32>} : memref<8x1xf32, #tpu.memory_space<vmem>>, vector<8x1xf32>,
    } else {
    }
    %c1_i32_20 = arith.constant 1 : i32
    %28 = arith.cmpi sge, %arg1, %c1_i32_20 : i32
    %29 = arith.extui %28 : i1 to i32
    %c0_i32_21 = arith.constant 0 : i32
    %30 = arith.cmpi ne, %29, %c0_i32_21 : i32
    scf.if %30 {
      %c1 = arith.constant 1 : index
      %c0_29 = arith.constant 0 : index
      %c0_30 = arith.constant 0 : index
      %42 = vector.load %arg10[%c1, %c0_29, %c0_30] : memref<2x8x8xf32, #tpu.memory_space<vmem>>, vector<1x8x8xf32>
      %43 = vector.shape_cast %42 : vector<1x8x8xf32> to vector<8x8xf32>
      %44 = vector.broadcast %22#0 : vector<8x1xf32> to vector<8x8xf32>
      %45 = arith.subf %43, %44 : vector<8x8xf32>
      %cst_31 = arith.constant 0.000000e+00 : f32
      %46 = vector.broadcast %cst_31 : f32 to vector<8x8xf32>
      %47 = arith.maximumf %45, %46 : vector<8x8xf32>
      %c0_32 = arith.constant 0 : index
      %c0_33 = arith.constant 0 : index
      %48 = vector.load %arg11[%c0_32, %c0_33] : memref<8x1xf32, #tpu.memory_space<vmem>>, vector<8x1xf32>
      %49 = arith.mulf %47, %47 : vector<8x8xf32>
      %cst_34 = arith.constant dense<0.000000e+00> : vector<8xf32>
      %50 = vector.multi_reduction <add>, %49, %cst_34 [1] : vector<8x8xf32> to vector<8xf32>
      %51 = vector.shape_cast %50 : vector<8xf32> to vector<8x1xf32>
      %52 = arith.addf %48, %51 : vector<8x1xf32>
      %c0_35 = arith.constant 0 : index
      %c0_36 = arith.constant 0 : index
      %53 = vector.load %arg11[%c0_35, %c0_36] : memref<8x1xf32, #tpu.memory_space<vmem>>, vector<8x1xf32>
      tpu.vector_store %arg11[%c0_35, %c0_36], %52 {strides = array<i32>} : memref<8x1xf32, #tpu.memory_space<vmem>>, vector<8x1xf32>,
    } else {
    }
    %c0_22 = arith.constant 0 : index
    %c0_23 = arith.constant 0 : index
    %31 = vector.load %arg11[%c0_22, %c0_23] : memref<8x1xf32, #tpu.memory_space<vmem>>, vector<8x1xf32>
    %32 = tpu.reciprocal %31 {approx = true} : vector<8x1xf32> -> vector<8x1xf32>
    %c0_i32_24 = arith.constant 0 : i32
    %33 = arith.cmpi sge, %arg1, %c0_i32_24 : i32
    %34 = arith.extui %33 : i1 to i32
    %c0_i32_25 = arith.constant 0 : i32
    %35 = arith.cmpi ne, %34, %c0_i32_25 : i32
    scf.if %35 {
      %c0_29 = arith.constant 0 : index
      %c0_30 = arith.constant 0 : index
      %c0_31 = arith.constant 0 : index
      %42 = vector.load %arg10[%c0_29, %c0_30, %c0_31] : memref<2x8x8xf32, #tpu.memory_space<vmem>>, vector<1x8x8xf32>
      %43 = vector.shape_cast %42 : vector<1x8x8xf32> to vector<8x8xf32>
      %44 = vector.broadcast %22#0 : vector<8x1xf32> to vector<8x8xf32>
      %45 = arith.subf %43, %44 : vector<8x8xf32>
      %cst_32 = arith.constant 0.000000e+00 : f32
      %46 = vector.broadcast %cst_32 : f32 to vector<8x8xf32>
      %47 = arith.maximumf %45, %46 : vector<8x8xf32>
      %c0_33 = arith.constant 0 : index
      %c0_34 = arith.constant 0 : index
      %c0_35 = arith.constant 0 : index
      %48 = vector.load %arg9[%c0_33, %c0_34, %c0_35] : memref<1x8x16xf32, #tpu.memory_space<vmem>>, vector<1x8x8xf32>
      %49 = vector.shape_cast %48 : vector<1x8x8xf32> to vector<8x8xf32>
      %50 = arith.mulf %47, %47 : vector<8x8xf32>
      %51 = vector.broadcast %32 : vector<8x1xf32> to vector<8x8xf32>
      %52 = arith.mulf %50, %51 : vector<8x8xf32>
      %53 = arith.addf %49, %52 : vector<8x8xf32>
      %c0_36 = arith.constant 0 : index
      %c0_37 = arith.constant 0 : index
      %c0_38 = arith.constant 0 : index
      %54 = vector.load %arg9[%c0_36, %c0_37, %c0_38] : memref<1x8x16xf32, #tpu.memory_space<vmem>>, vector<1x8x8xf32>
      %55 = vector.shape_cast %54 : vector<1x8x8xf32> to vector<8x8xf32>
      %56 = vector.shape_cast %53 : vector<8x8xf32> to vector<1x8x8xf32>
      tpu.vector_store %arg9[%c0_36, %c0_37, %c0_38], %56 {strides = array<i32>} : memref<1x8x16xf32, #tpu.memory_space<vmem>>, vector<1x8x8xf32>,
    } else {
    }
    %c1_i32_26 = arith.constant 1 : i32
    %36 = arith.cmpi sge, %arg1, %c1_i32_26 : i32
    %37 = arith.extui %36 : i1 to i32
    %c0_i32_27 = arith.constant 0 : i32
    %38 = arith.cmpi ne, %37, %c0_i32_27 : i32
    scf.if %38 {
      %c1 = arith.constant 1 : index
      %c0_29 = arith.constant 0 : index
      %c0_30 = arith.constant 0 : index
      %42 = vector.load %arg10[%c1, %c0_29, %c0_30] : memref<2x8x8xf32, #tpu.memory_space<vmem>>, vector<1x8x8xf32>
      %43 = vector.shape_cast %42 : vector<1x8x8xf32> to vector<8x8xf32>
      %44 = vector.broadcast %22#0 : vector<8x1xf32> to vector<8x8xf32>
      %45 = arith.subf %43, %44 : vector<8x8xf32>
      %cst_31 = arith.constant 0.000000e+00 : f32
      %46 = vector.broadcast %cst_31 : f32 to vector<8x8xf32>
      %47 = arith.maximumf %45, %46 : vector<8x8xf32>
      %c0_32 = arith.constant 0 : index
      %c0_33 = arith.constant 0 : index
      %c8 = arith.constant 8 : index
      %48 = vector.load %arg9[%c0_32, %c0_33, %c8] : memref<1x8x16xf32, #tpu.memory_space<vmem>>, vector<1x8x8xf32>
      %49 = vector.shape_cast %48 : vector<1x8x8xf32> to vector<8x8xf32>
      %50 = arith.mulf %47, %47 : vector<8x8xf32>
      %51 = vector.broadcast %32 : vector<8x1xf32> to vector<8x8xf32>
      %52 = arith.mulf %50, %51 : vector<8x8xf32>
      %53 = arith.addf %49, %52 : vector<8x8xf32>
      %c0_34 = arith.constant 0 : index
      %c0_35 = arith.constant 0 : index
      %c8_36 = arith.constant 8 : index
      %54 = vector.load %arg9[%c0_34, %c0_35, %c8_36] : memref<1x8x16xf32, #tpu.memory_space<vmem>>, vector<1x8x8xf32>
      %55 = vector.shape_cast %54 : vector<1x8x8xf32> to vector<8x8xf32>
      %56 = vector.shape_cast %53 : vector<8x8xf32> to vector<1x8x8xf32>
      tpu.vector_store %arg9[%c0_34, %c0_35, %c8_36], %56 {strides = array<i32>} : memref<1x8x16xf32, #tpu.memory_space<vmem>>, vector<1x8x8xf32>,
    } else {
    }
    %c3_i32 = arith.constant 3 : i32
    %39 = arith.cmpi eq, %arg2, %c3_i32 : i32
    %40 = arith.extui %39 : i1 to i32
    %c0_i32_28 = arith.constant 0 : i32
    %41 = arith.cmpi ne, %40, %c0_i32_28 : i32
    scf.if %41 {
      %c0_29 = arith.constant 0 : index
      %c0_30 = arith.constant 0 : index
      %c0_31 = arith.constant 0 : index
      %42 = vector.load %arg9[%c0_29, %c0_30, %c0_31] : memref<1x8x16xf32, #tpu.memory_space<vmem>>, vector<1x8x16xf32>
      %43 = vector.shape_cast %42 : vector<1x8x16xf32> to vector<8x16xf32>
      %cst_32 = arith.constant 2.500000e-01 : f32
      %44 = vector.broadcast %cst_32 : f32 to vector<8x16xf32>
      %45 = arith.mulf %43, %44 : vector<8x16xf32>
      %c0_33 = arith.constant 0 : index
      %c0_34 = arith.constant 0 : index
      %c0_35 = arith.constant 0 : index
      %46 = vector.load %arg9[%c0_33, %c0_34, %c0_35] : memref<1x8x16xf32, #tpu.memory_space<vmem>>, vector<1x8x16xf32>
      %47 = vector.shape_cast %46 : vector<1x8x16xf32> to vector<8x16xf32>
      %48 = vector.shape_cast %45 : vector<8x16xf32> to vector<1x8x16xf32>
      tpu.vector_store %arg9[%c0_33, %c0_34, %c0_35], %48 {strides = array<i32>} : memref<1x8x16xf32, #tpu.memory_space<vmem>>, vector<1x8x16xf32>,
      %c0_36 = arith.constant 0 : index
      %c0_37 = arith.constant 0 : index
      %c0_38 = arith.constant 0 : index
      %49 = vector.load %arg5[%c0_36, %c0_37, %c0_38] : memref<1x16x8xf32, #tpu.memory_space<vmem>>, vector<1x16x8xf32>
      %50 = vector.shape_cast %49 : vector<1x16x8xf32> to vector<16x8xf32>
      %cst_39 = arith.constant dense<0.000000e+00> : vector<8x8xf32>
      %51 = tpu.matmul %45, %50, %cst_39 {dimension_numbers = #tpu.dot_dimension_numbers<[1], [0], [0], [1], [0, 0, 1, 1], [], []>} : vector<8x16xf32>, vector<16x8xf32>, vector<8x8xf32> -> vector<8x8xf32>
      %c0_40 = arith.constant 0 : index
      %c0_41 = arith.constant 0 : index
      %52 = vector.load %arg6[%c0_40, %c0_41] : memref<8x32xf32, #tpu.memory_space<vmem>>, vector<8x32xf32>
      %cst_42 = arith.constant dense<0.000000e+00> : vector<8x32xf32>
      %53 = tpu.matmul %51, %52, %cst_42 {dimension_numbers = #tpu.dot_dimension_numbers<[1], [0], [0], [1], [0, 0, 1, 1], [], []>} : vector<8x8xf32>, vector<8x32xf32>, vector<8x32xf32> -> vector<8x32xf32>
      %c0_43 = arith.constant 0 : index
      %c0_44 = arith.constant 0 : index
      %54 = vector.load %arg7[%c0_43, %c0_44] : memref<1x32xf32, #tpu.memory_space<vmem>>, vector<1x32xf32>
      %55 = vector.broadcast %54 : vector<1x32xf32> to vector<8x32xf32>
      %56 = arith.addf %53, %55 : vector<8x32xf32>
      %c0_45 = arith.constant 0 : index
      %c0_46 = arith.constant 0 : index
      %c0_47 = arith.constant 0 : index
      %57 = vector.load %arg8[%c0_45, %c0_46, %c0_47] : memref<1x8x32xf32, #tpu.memory_space<vmem>>, vector<1x8x32xf32>
      %58 = vector.shape_cast %57 : vector<1x8x32xf32> to vector<8x32xf32>
      %59 = vector.shape_cast %56 : vector<8x32xf32> to vector<1x8x32xf32>
      tpu.vector_store %arg8[%c0_45, %c0_46, %c0_47], %59 {strides = array<i32>} : memref<1x8x32xf32, #tpu.memory_space<vmem>>, vector<1x8x32xf32>,
    } else {
    }
    return
  }
  func.func @transform_0(%arg0: i32, %arg1: i32, %arg2: i32) -> (i32, i32, i32, i32) {
    %c0_i32 = arith.constant 0 : i32
    %c0_i32_0 = arith.constant 0 : i32
    return %arg0, %arg2, %arg1, %c0_i32 : i32, i32, i32, i32
  }
  func.func @transform_1(%arg0: i32, %arg1: i32, %arg2: i32) -> (i32, i32, i32, i32) {
    %c0_i32 = arith.constant 0 : i32
    %c0_i32_0 = arith.constant 0 : i32
    %c0_i32_1 = arith.constant 0 : i32
    return %arg0, %arg2, %c0_i32, %c0_i32_0 : i32, i32, i32, i32
  }
  func.func @transform_2(%arg0: i32, %arg1: i32, %arg2: i32) -> (i32, i32, i32) {
    %c0_i32 = arith.constant 0 : i32
    %c0_i32_0 = arith.constant 0 : i32
    %c0_i32_1 = arith.constant 0 : i32
    return %arg0, %c0_i32, %c0_i32_0 : i32, i32, i32
  }
  func.func @transform_3(%arg0: i32, %arg1: i32, %arg2: i32) -> (i32, i32) {
    %c0_i32 = arith.constant 0 : i32
    %c0_i32_0 = arith.constant 0 : i32
    %c0_i32_1 = arith.constant 0 : i32
    return %c0_i32, %c0_i32_0 : i32, i32
  }
  func.func @transform_4(%arg0: i32, %arg1: i32, %arg2: i32) -> (i32, i32) {
    %c0_i32 = arith.constant 0 : i32
    %c0_i32_0 = arith.constant 0 : i32
    %c0_i32_1 = arith.constant 0 : i32
    return %c0_i32, %c0_i32_0 : i32, i32
  }
  func.func @transform_5(%arg0: i32, %arg1: i32, %arg2: i32) -> (i32, i32, i32) {
    %c0_i32 = arith.constant 0 : i32
    %c0_i32_0 = arith.constant 0 : i32
    return %arg0, %arg1, %c0_i32 : i32, i32, i32
  }
  func.func @transform_6(%arg0: i32, %arg1: i32, %arg2: i32) -> (i32, i32, i32) {
    %c0_i32 = arith.constant 0 : i32
    %c0_i32_0 = arith.constant 0 : i32
    return %arg0, %arg1, %c0_i32 : i32, i32, i32
  }
}

</mosaic_0001>

<llo_original>
// kernel: tpu_custom_call.1
$region0: #{tpu_custom_call.1}
  #allocation0 [shape = 'u32[]', space=smem, size = 0x4, offset = 0x4, fixed_abs, tag = 'smem constant byte address 0x4 - core index']
  #allocation1 [shape = 'u32[144,128]{1,0:T(1,128)}', space=vmem, size = 0x12000, scoped, tag = 'internal scratch']
  #allocation2 [shape = 'f32[2,8,8]{2,1,0:T(8,128)}', space=vmem, size = 0x2000, scoped, tag = 'scratch operand']
  #allocation3 [shape = 'f32[8,1]{1,0:T(8,128)}', space=vmem, size = 0x1000, scoped, tag = 'scratch operand']
  %s0 = inlined_call_operand.vmem [shape: f32[2,4,16,8], index: 0, kind: input, shape index: {}]
  %s1 = inlined_call_operand.vmem [shape: f32[2,4,16,8], index: 1, kind: input, shape index: {}]
  %s2 = inlined_call_operand.vmem [shape: f32[2,16,8], index: 2, kind: input, shape index: {}]
  %s3 = inlined_call_operand.vmem [shape: f32[8,32], index: 3, kind: input, shape index: {}]
  %s4 = inlined_call_operand.vmem [shape: f32[1,32], index: 4, kind: input, shape index: {}]
  %s5 = inlined_call_operand.hbm [shape: f32[2,16,32], index: 5, kind: output, shape index: {0}]
  %s6 = inlined_call_operand.hbm [shape: f32[2,16,16], index: 6, kind: output, shape index: {1}]
  %7 = xla_tuple %s5, %s6
  %s8 = sld [smem:[#allocation0]]
  $region108: #{tpu_custom_call.1} parent=0
    _
  %s10 = ssub.s32 1, %s8
  %s11 = scalar_select 0, %s10, %s8
  $region1: #{tpu_custom_call.1} parent=0
    #allocation4 [shape = 'u8[8192]{0}', space=vmem, size = 0x2000, scoped, tag = 'output window, operand 0']
    #allocation5 [shape = 's32[2]{0}', space=sflag, size = 0x8, scoped, tag = 'scoped memory for tpu_custom_call.1']
    #allocation6 [shape = 'u8[8192]{0}', space=vmem, size = 0x2000, scoped, tag = 'output window, operand 1']
    #allocation7 [shape = 's32[2]{0}', space=sflag, size = 0x8, scoped, tag = 'scoped memory for tpu_custom_call.1']
    %12 = vsyncpa [#allocation5], 0
    %s13 = scalar_lea.sflag [#allocation5], 1
    %14 = vsyncpa %s13, 0
    %15 = vsyncpa [#allocation7], 0
    %s16 = scalar_lea.sflag [#allocation7], 1
    %17 = vsyncpa %s16, 0
    loop: start=0, step=1, limit=18
    $region2: #{tpu_custom_call.1} parent=1 // loop_pre_header
      _
    $region3: #{tpu_custom_call.1} parent=1 // loop_header
      %s19 = sphi 0, %s23
      %p20 = scmp.ge.s32.totalorder %s19, 18
      %s26 = sphi 0, %s45
      %s27 = sphi 0, %s41
      %s28 = sphi 0, %s37
      %s29 = sphi 0, %s26
      %s30 = sphi 0, %s27
      %s31 = sphi 0, %s28
      %s32 = sphi 0, %s29
      %s33 = sphi 0, %s30
      %s34 = sphi 0, %s31
      %s52 = sphi 0, %s54
      %s55 = sphi 0, %s52
      %s56 = sphi 0, %s55
      %s72 = sphi 0, %s56
      %s80 = sphi 0, %s82
      %s83 = sphi 0, %s80
      %s84 = sphi 0, %s83
      %s100 = sphi 0, %s84
      %s106 = sphi 0, %s108
      %s109 = sphi 0, %s106
      %s110 = sphi 0, %s109
      %s126 = sphi 0, %s110
      %s130 = sphi 0, %s130
      %s132 = sphi 0, %s130
      %s133 = sphi 0, %s132
      %s147 = sphi 0, %s133
      %s151 = sphi 0, %s151
      %s153 = sphi 0, %s151
      %s154 = sphi 0, %s153
      %s168 = sphi 0, %s154
      %s176 = sphi 0, %s178
      %s179 = sphi 0, %s176
      %s180 = sphi 0, %s179
      %s196 = sphi 0, %s180
      %s204 = sphi 0, %s206
      %s207 = sphi 0, %s204
      %s208 = sphi 0, %s207
      %s224 = sphi 0, %s208
    $region4: #{tpu_custom_call.1} parent=1 // loop_header_branch
      %22 = sbr.rel (%p20) target = $region8
    $region5: #{tpu_custom_call.1} parent=1 // loop_body
      %s24 = ssub.s32 %s19, 1
      %s25 = ssub.s32 %s19, 2
      %s35 = sadd.s32 1, %s28
      %p36 = scmp.ge.s32.totalorder %s35, 4
      %s37 = scalar_select %p36, 0, %s35
      %s38 = sadd.s32 1, %s27
      %s39 = scalar_select %p36, %s38, %s27
      %p40 = scmp.ge.s32.totalorder %s39, 2
      %s41 = scalar_select %p40, 0, %s39
      %s42 = sadd.s32 1, %s26
      %s43 = scalar_select %p40, %s42, %s26
      %p44 = scmp.ge.s32.totalorder %s43, 2
      %s45 = scalar_select %p44, 0, %s43
      %s46 = ssub.s32 %s26, %s45
      %s47 = ssub.s32 %s28, %s37
      %s48 = sor.u32 %s46, %s47
      %s49 = ssub.s32 %s27, %s41
      %s50 = sor.u32 %s48, %s49
      %p51 = scmp.eq.s32.totalorder %s50, 0
      %s53 = sadd.s32 %s52, 1
      %s54 = scalar_select %p51, %s52, %s53
      %p57 = pneg %p51
      %p58 = scmp.eq.s32.totalorder %s19, 15
      %p59 = por %p57, %p58
      %p60 = scmp.ne.s32.totalorder %s52, %s55
      %p61 = scmp.eq.s32.totalorder %s19, 0
      %p62 = por %p60, %p61
      %p63 = scmp.ne.s32.totalorder %s52, %s55
      %p64 = scmp.eq.s32.totalorder %s24, 15
      %p65 = por %p63, %p64
      %p66 = scmp.ne.s32.totalorder %s55, %s56
      %p67 = scmp.eq.s32.totalorder %s24, 0
      %p68 = por %p66, %p67
      %p69 = scmp.ne.s32.totalorder %s55, %s56
      %p70 = scmp.eq.s32.totalorder %s25, 15
      %p71 = por %p69, %p70
      %p73 = scmp.ne.s32.totalorder %s56, %s72
      %p74 = scmp.eq.s32.totalorder %s25, 0
      %p75 = por %p73, %p74
      %s76 = ssub.s32 %s26, %s45
      %s77 = ssub.s32 %s28, %s37
      %s78 = sor.u32 %s76, %s77
      %p79 = scmp.eq.s32.totalorder %s78, 0
      %s81 = sadd.s32 %s80, 1
      %s82 = scalar_select %p79, %s80, %s81
      %p85 = pneg %p79
      %p86 = scmp.eq.s32.totalorder %s19, 15
      %p87 = por %p85, %p86
      %p88 = scmp.ne.s32.totalorder %s80, %s83
      %p89 = scmp.eq.s32.totalorder %s19, 0
      %p90 = por %p88, %p89
      %p91 = scmp.ne.s32.totalorder %s80, %s83
      %p92 = scmp.eq.s32.totalorder %s24, 15
      %p93 = por %p91, %p92
      %p94 = scmp.ne.s32.totalorder %s83, %s84
      %p95 = scmp.eq.s32.totalorder %s24, 0
      %p96 = por %p94, %p95
      %p97 = scmp.ne.s32.totalorder %s83, %s84
      %p98 = scmp.eq.s32.totalorder %s25, 15
      %p99 = por %p97, %p98
      %p101 = scmp.ne.s32.totalorder %s84, %s100
      %p102 = scmp.eq.s32.totalorder %s25, 0
      %p103 = por %p101, %p102
      %s104 = ssub.s32 %s26, %s45
      %p105 = scmp.eq.s32.totalorder %s104, 0
      %s107 = sadd.s32 %s106, 1
      %s108 = scalar_select %p105, %s106, %s107
      %p111 = pneg %p105
      %p112 = scmp.eq.s32.totalorder %s19, 15
      %p113 = por %p111, %p112
      %p114 = scmp.ne.s32.totalorder %s106, %s109
      %p115 = scmp.eq.s32.totalorder %s19, 0
      %p116 = por %p114, %p115
      %p117 = scmp.ne.s32.totalorder %s106, %s109
      %p118 = scmp.eq.s32.totalorder %s24, 15
      %p119 = por %p117, %p118
      %p120 = scmp.ne.s32.totalorder %s109, %s110
      %p121 = scmp.eq.s32.totalorder %s24, 0
      %p122 = por %p120, %p121
      %p123 = scmp.ne.s32.totalorder %s109, %s110
      %p124 = scmp.eq.s32.totalorder %s25, 15
      %p125 = por %p123, %p124
      %p127 = scmp.ne.s32.totalorder %s110, %s126
      %p128 = scmp.eq.s32.totalorder %s25, 0
      %p129 = por %p127, %p128
      %s131 = sadd.s32 %s130, 1
      %p134 = scmp.eq.s32.totalorder %s19, 15
      %p135 = scmp.ne.s32.totalorder %s130, %s132
      %p136 = scmp.eq.s32.totalorder %s19, 0
      %p137 = por %p135, %p136
      %p138 = scmp.ne.s32.totalorder %s130, %s132
      %p139 = scmp.eq.s32.totalorder %s24, 15
      %p140 = por %p138, %p139
      %p141 = scmp.ne.s32.totalorder %s132, %s133
      %p142 = scmp.eq.s32.totalorder %s24, 0
      %p143 = por %p141, %p142
      %p144 = scmp.ne.s32.totalorder %s132, %s133
      %p145 = scmp.eq.s32.totalorder %s25, 15
      %p146 = por %p144, %p145
      %p148 = scmp.ne.s32.totalorder %s133, %s147
      %p149 = scmp.eq.s32.totalorder %s25, 0
      %p150 = por %p148, %p149
      %s152 = sadd.s32 %s151, 1
      %p155 = scmp.eq.s32.totalorder %s19, 15
      %p156 = scmp.ne.s32.totalorder %s151, %s153
      %p157 = scmp.eq.s32.totalorder %s19, 0
      %p158 = por %p156, %p157
      %p159 = scmp.ne.s32.totalorder %s151, %s153
      %p160 = scmp.eq.s32.totalorder %s24, 15
      %p161 = por %p159, %p160
      %p162 = scmp.ne.s32.totalorder %s153, %s154
      %p163 = scmp.eq.s32.totalorder %s24, 0
      %p164 = por %p162, %p163
      %p165 = scmp.ne.s32.totalorder %s153, %s154
      %p166 = scmp.eq.s32.totalorder %s25, 15
      %p167 = por %p165, %p166
      %p169 = scmp.ne.s32.totalorder %s154, %s168
      %p170 = scmp.eq.s32.totalorder %s25, 0
      %p171 = por %p169, %p170
      %s172 = ssub.s32 %s26, %s45
      %s173 = ssub.s32 %s27, %s41
      %s174 = sor.u32 %s172, %s173
      %p175 = scmp.eq.s32.totalorder %s174, 0
      %s177 = sadd.s32 %s176, 1
      %s178 = scalar_select %p175, %s176, %s177
      %p181 = pneg %p175
      %p182 = scmp.eq.s32.totalorder %s19, 15
      %p183 = por %p181, %p182
      %p184 = scmp.ne.s32.totalorder %s176, %s179
      %p185 = scmp.eq.s32.totalorder %s19, 0
      %p186 = por %p184, %p185
      %p187 = scmp.ne.s32.totalorder %s176, %s179
      %p188 = scmp.eq.s32.totalorder %s24, 15
      %p189 = por %p187, %p188
      %p190 = scmp.ne.s32.totalorder %s179, %s180
      %p191 = scmp.eq.s32.totalorder %s24, 0
      %p192 = por %p190, %p191
      %p193 = scmp.ne.s32.totalorder %s179, %s180
      %p194 = scmp.eq.s32.totalorder %s25, 15
      %p195 = por %p193, %p194
      %p197 = scmp.ne.s32.totalorder %s180, %s196
      %p198 = scmp.eq.s32.totalorder %s25, 0
      %p199 = por %p197, %p198
      %s200 = ssub.s32 %s26, %s45
      %s201 = ssub.s32 %s27, %s41
      %s202 = sor.u32 %s200, %s201
      %p203 = scmp.eq.s32.totalorder %s202, 0
      %s205 = sadd.s32 %s204, 1
      %s206 = scalar_select %p203, %s204, %s205
      %p209 = pneg %p203
      %p210 = scmp.eq.s32.totalorder %s19, 15
      %p211 = por %p209, %p210
      %p212 = scmp.ne.s32.totalorder %s204, %s207
      %p213 = scmp.eq.s32.totalorder %s19, 0
      %p214 = por %p212, %p213
      %p215 = scmp.ne.s32.totalorder %s204, %s207
      %p216 = scmp.eq.s32.totalorder %s24, 15
      %p217 = por %p215, %p216
      %p218 = scmp.ne.s32.totalorder %s207, %s208
      %p219 = scmp.eq.s32.totalorder %s24, 0
      %p220 = por %p218, %p219
      %p221 = scmp.ne.s32.totalorder %s207, %s208
      %p222 = scmp.eq.s32.totalorder %s25, 15
      %p223 = por %p221, %p222
      %p225 = scmp.ne.s32.totalorder %s208, %s224
      %p226 = scmp.eq.s32.totalorder %s25, 0
      %p227 = por %p225, %p226
      %p228 = scmp.le.s32.totalorder 1, %s19
      %p229 = scmp.lt.s32.totalorder %s19, 17
      %p230 = pnand %p228, %p229
      %p231 = pneg %p230
      // Predicated region
      $region9: #{tpu_custom_call.1} parent=5 // pred_check
        _
      $region10: #{tpu_custom_call.1} parent=5 // pred_check_branch
        %233 = sbr.rel (%p230) target = $region12
      $region11: #{tpu_custom_call.1} parent=5 // pred_region
        %s234 = ssub.s32 %s19, 1
        // Predicated region
        $region13: #{tpu_custom_call.1} parent=11 // pred_check
          %p235 = pneg %p143
        $region14: #{tpu_custom_call.1} parent=11 // pred_check_branch
          %237 = sbr.rel (%p235) target = $region16
        $region15: #{tpu_custom_call.1} parent=11 // pred_region
          _
        $region16: #{tpu_custom_call.1} parent=11 // pred_fallthru
          _
        // Predicated region
        $region17: #{tpu_custom_call.1} parent=11 // pred_check
          %p238 = pneg %p164
        $region18: #{tpu_custom_call.1} parent=11 // pred_check_branch
          %240 = sbr.rel (%p238) target = $region20
        $region19: #{tpu_custom_call.1} parent=11 // pred_region
          _
        $region20: #{tpu_custom_call.1} parent=11 // pred_fallthru
          _
      $region12: #{tpu_custom_call.1} parent=5 // pred_fallthru
        _
      %p241 = scmp.lt.s32.totalorder %s19, 16
      // Predicated region
      $region21: #{tpu_custom_call.1} parent=5 // pred_check
        %p242 = pneg %p241
      $region22: #{tpu_custom_call.1} parent=5 // pred_check_branch
        %244 = sbr.rel (%p242) target = $region24
      $region23: #{tpu_custom_call.1} parent=5 // pred_region
        // Predicated region
        $region25: #{tpu_custom_call.1} parent=23 // pred_check
          %p245 = pneg %p62
        $region26: #{tpu_custom_call.1} parent=23 // pred_check_branch
          %247 = sbr.rel (%p245) target = $region28
        $region27: #{tpu_custom_call.1} parent=23 // pred_region
          %p248 = scmp.lt.s32.totalorder %s26, 1
          %s249 = scalar_select %p248, %s26, 1
          %p250 = scmp.lt.s32.totalorder %s28, 3
          %s251 = scalar_select %p250, %s28, 3
          %p252 = scmp.lt.s32.totalorder %s27, 1
          %s253 = scalar_select %p252, %s27, 1
          %s254 = smul.addr %s251, 2
          %s255 = sadd.s32 %s253, %s254
          %s256 = smul.addr %s249, 8
          %s257 = sadd.s32 %s255, %s256
          %s258 = smul.addr %s257, 8
          %s259 = scalar_lea.vmem %s0, %s258
        $region28: #{tpu_custom_call.1} parent=23 // pred_fallthru
          _
        // Predicated region
        $region29: #{tpu_custom_call.1} parent=23 // pred_check
          %p260 = pneg %p90
        $region30: #{tpu_custom_call.1} parent=23 // pred_check_branch
          %262 = sbr.rel (%p260) target = $region32
        $region31: #{tpu_custom_call.1} parent=23 // pred_region
          %p263 = scmp.lt.s32.totalorder %s26, 1
          %s264 = scalar_select %p263, %s26, 1
          %p265 = scmp.lt.s32.totalorder %s28, 3
          %s266 = scalar_select %p265, %s28, 3
          %s267 = smul.addr %s266, 2
          %s268 = smul.addr %s264, 8
          %s269 = sadd.s32 %s267, %s268
          %s270 = smul.addr %s269, 8
          %s271 = scalar_lea.vmem %s1, %s270
        $region32: #{tpu_custom_call.1} parent=23 // pred_fallthru
          _
        // Predicated region
        $region33: #{tpu_custom_call.1} parent=23 // pred_check
          %p272 = pneg %p116
        $region34: #{tpu_custom_call.1} parent=23 // pred_check_branch
          %274 = sbr.rel (%p272) target = $region36
        $region35: #{tpu_custom_call.1} parent=23 // pred_region
          %p275 = scmp.lt.s32.totalorder %s26, 1
          %s276 = scalar_select %p275, %s26, 1
          %s277 = smul.addr %s276, 2
          %s278 = smul.addr %s277, 8
          %s279 = scalar_lea.vmem %s2, %s278
        $region36: #{tpu_custom_call.1} parent=23 // pred_fallthru
          _
      $region24: #{tpu_custom_call.1} parent=5 // pred_fallthru
        _
      %p280 = scmp.le.s32.totalorder 1, %s19
      %p281 = scmp.lt.s32.totalorder %s19, 17
      %p282 = pnand %p280, %p281
      %p283 = pneg %p282
      // Predicated region
      $region37: #{tpu_custom_call.1} parent=5 // pred_check
        _
      $region38: #{tpu_custom_call.1} parent=5 // pred_check_branch
        %285 = sbr.rel (%p282) target = $region40
      $region39: #{tpu_custom_call.1} parent=5 // pred_region
        %s286 = ssub.s32 %s19, 1
        %p287 = scmp.lt.s32.totalorder %s29, 1
        %s288 = scalar_select %p287, %s29, 1
        %p289 = scmp.lt.s32.totalorder %s31, 3
        %s290 = scalar_select %p289, %s31, 3
        %p291 = scmp.lt.s32.totalorder %s30, 1
        %s292 = scalar_select %p291, %s30, 1
        %s293 = smul.addr %s290, 2
        %s294 = sadd.s32 %s292, %s293
        %s295 = smul.addr %s288, 8
        %s296 = sadd.s32 %s294, %s295
        %s297 = smul.addr %s296, 8
        %s298 = scalar_lea.vmem %s0, %s297
        %p299 = pneg %p68
        %p300 = pneg %p65
        %p301 = scmp.lt.s32.totalorder %s29, 1
        %s302 = scalar_select %p301, %s29, 1
        %p303 = scmp.lt.s32.totalorder %s31, 3
        %s304 = scalar_select %p303, %s31, 3
        %s305 = smul.addr %s304, 2
        %s306 = smul.addr %s302, 8
        %s307 = sadd.s32 %s305, %s306
        %s308 = smul.addr %s307, 8
        %s309 = scalar_lea.vmem %s1, %s308
        %p310 = pneg %p96
        %p311 = pneg %p93
        %p312 = scmp.lt.s32.totalorder %s29, 1
        %s313 = scalar_select %p312, %s29, 1
        %s314 = smul.addr %s313, 2
        %s315 = smul.addr %s314, 8
        %s316 = scalar_lea.vmem %s2, %s315
        %p317 = pneg %p122
        %p318 = pneg %p119
        %p319 = pneg %p143
        %p320 = pneg %p140
        %p321 = pneg %p164
        %p322 = pneg %p161
        %p323 = pneg %p192
        %p324 = pneg %p189
        %s325 = sand.u32 %s179, 1
        %s326 = scalar_lea.sflag [#allocation5], %s325
        %s327 = sand.u32 %s179, 1
        %s328 = smul.addr %s327, 8
        %s329 = scalar_lea.vmem [#allocation4], %s328
        %p330 = pneg %p220
        %p331 = pneg %p217
        %s332 = sand.u32 %s207, 1
        %s333 = scalar_lea.sflag [#allocation7], %s332
        %s334 = sand.u32 %s207, 1
        %s335 = smul.addr %s334, 8
        %s336 = scalar_lea.vmem [#allocation6], %s335
        %p337 = scmp.lt.s32.totalorder %s29, 1
        %s338 = scalar_select %p337, %s29, 1
        %p339 = scmp.lt.s32.totalorder %s31, 3
        %s340 = scalar_select %p339, %s31, 3
        %p341 = scmp.lt.s32.totalorder %s30, 1
        %s342 = scalar_select %p341, %s30, 1
        %s343 = smul.addr %s340, 2
        %s344 = sadd.s32 %s342, %s343
        %s345 = smul.addr %s338, 8
        %s346 = sadd.s32 %s344, %s345
        %s347 = smul.addr %s346, 8
        %s348 = scalar_lea.vmem %s0, %s347
        %p349 = scmp.lt.s32.totalorder %s29, 1
        %s350 = scalar_select %p349, %s29, 1
        %p351 = scmp.lt.s32.totalorder %s31, 3
        %s352 = scalar_select %p351, %s31, 3
        %s353 = smul.addr %s352, 2
        %s354 = smul.addr %s350, 8
        %s355 = sadd.s32 %s353, %s354
        %s356 = smul.addr %s355, 8
        %s357 = scalar_lea.vmem %s1, %s356
        %p358 = scmp.lt.s32.totalorder %s29, 1
        %s359 = scalar_select %p358, %s29, 1
        %s360 = smul.addr %s359, 2
        %s361 = smul.addr %s360, 8
        %s362 = scalar_lea.vmem %s2, %s361
        %p363 = scmp.eq.s32.totalorder %s31, 0
        // Predicated region
        $region41: #{tpu_custom_call.1} parent=39 // pred_check
          %p364 = pneg %p363
        $region42: #{tpu_custom_call.1} parent=39 // pred_check_branch
          %366 = sbr.rel (%p364) target = $region44
        $region43: #{tpu_custom_call.1} parent=39 // pred_region
          %vm367 = vcmask 130048
          %368 = vst.msk [vmem:[%s336] sm:$0xff] %vm367, 0.0
        $region44: #{tpu_custom_call.1} parent=39 // pred_fallthru
          _
        %v369 = vld [vmem:[%s348] sm:$0xff]
        %v370 = vlaneseq
        %v371 = vshrl.u32 %v370, 7
        %s372 = smul.u32 %s30, 8
        %v373 = vstv %s372
        %v374 = vadd.s32 %v371, %v373
        %v375 = vlaneseq
        %v376 = vand.u32 %v375, 127
        %vm377 = vcmask 7168
        %378 = vst.msk [vmem:[#allocation3] sm:$0xff] %vm377, -1e+30
        %p379 = scmp.ge.s32.totalorder %s30, 0
        // Predicated region
        $region45: #{tpu_custom_call.1} parent=39 // pred_check
          %p380 = pneg %p379
        $region46: #{tpu_custom_call.1} parent=39 // pred_check_branch
          %382 = sbr.rel (%p380) target = $region48
        $region47: #{tpu_custom_call.1} parent=39 // pred_region
          %v383 = vld [vmem:[%s357] sm:$0xff]
          %vm384 = vcmask 64512
          %v386 = vsel %vm384, %v369, 0
          %v389 = vsel %vm384, %v383, 0
          %391 = vmatprep.subr.mxu0 0.0
          %392 = vmatpush1.xpose.msra.mxu0 %v389
          %393 = vmatprep.subr.mxu0 0.0
          %394 = vmatpush1.xpose.msra.mxu0 0.0
          %395 = vmatprep.subr.mxu0 0.0
          %396 = vmatpush1.xpose.msra.mxu0 0.0
          %397 = vmatprep.subr.mxu0 0.0
          %398 = vmatpush1.xpose.msra.mxu0 0.0
          %399 = vmatprep.subr.mxu0 0.0
          %400 = vmatpush1.xpose.msra.mxu0 0.0
          %401 = vmatprep.subr.mxu0 0.0
          %402 = vmatpush1.xpose.msra.mxu0 0.0
          %403 = vmatprep.subr.mxu0 0.0
          %404 = vmatpush1.xpose.msra.mxu0 0.0
          %405 = vmatprep.subr.mxu0 0.0
          %406 = vmatpush1.xpose.msra.mxu0 0.0
          %407 = vmatprep.subr.mxu0 0.0
          %408 = vmatpush1.xpose.msra.mxu0 0.0
          %409 = vmatprep.subr.mxu0 0.0
          %410 = vmatpush1.xpose.msra.mxu0 0.0
          %411 = vmatprep.subr.mxu0 0.0
          %412 = vmatpush1.xpose.msra.mxu0 0.0
          %413 = vmatprep.subr.mxu0 0.0
          %414 = vmatpush1.xpose.msra.mxu0 0.0
          %415 = vmatprep.subr.mxu0 0.0
          %416 = vmatpush1.xpose.msra.mxu0 0.0
          %417 = vmatprep.subr.mxu0 0.0
          %418 = vmatpush1.xpose.msra.mxu0 0.0
          %419 = vmatprep.subr.mxu0 0.0
          %420 = vmatpush1.xpose.msra.mxu0 0.0
          %421 = vmatprep.subr.mxu0 0.0
          %422 = vmatpush1.xpose.msra.mxu0 0.0
          %423 = vmatprep.subr.mxu0 0.0
          %424 = vmatpush1.xpose.msra.mxu0 0.0
          %425 = vmatprep.subr.mxu0 0.0
          %426 = vmatpush1.xpose.msra.mxu0 0.0
          %427 = vmatprep.subr.mxu0 0.0
          %428 = vmatpush1.xpose.msra.mxu0 0.0
          %429 = vmatprep.subr.mxu0 0.0
          %430 = vmatpush1.xpose.msra.mxu0 0.0
          %431 = vmatprep.subr.mxu0 0.0
          %432 = vmatpush1.xpose.msra.mxu0 0.0
          %433 = vmatprep.subr.mxu0 0.0
          %434 = vmatpush1.xpose.msra.mxu0 0.0
          %435 = vmatprep.subr.mxu0 0.0
          %436 = vmatpush1.xpose.msra.mxu0 0.0
          %437 = vmatprep.subr.mxu0 0.0
          %438 = vmatpush1.xpose.msra.mxu0 0.0
          %439 = vmatprep.subr.mxu0 0.0
          %440 = vmatpush1.xpose.msra.mxu0 0.0
          %441 = vmatprep.subr.mxu0 0.0
          %442 = vmatpush1.xpose.msra.mxu0 0.0
          %443 = vmatprep.subr.mxu0 0.0
          %444 = vmatpush1.xpose.msra.mxu0 0.0
          %445 = vmatprep.subr.mxu0 0.0
          %446 = vmatpush1.xpose.msra.mxu0 0.0
          %447 = vmatprep.subr.mxu0 0.0
          %448 = vmatpush1.xpose.msra.mxu0 0.0
          %449 = vmatprep.subr.mxu0 0.0
          %450 = vmatpush1.xpose.msra.mxu0 0.0
          %451 = vmatprep.subr.mxu0 0.0
          %452 = vmatpush1.xpose.msra.mxu0 0.0
          %453 = vmatprep.subr.mxu0 0.0
          %454 = vmatpush1.xpose.msra.mxu0 0.0
          %455 = vmatprep.mubr.f32.mxu0 0.0
          %456 = vmatmul.mubr.f32.gmra.mrb[0].mxu0 %v386
          %v457 = vpop.f32.mrb[0].mxu0
          %v458 = vadd.f32 0.0, %v457
          %v459 = vpop.f32.mrb[0].mxu0
          %460 = vdwg.mxu0
          %vm461 = vcmp.le.s32.totalorder %v376, %v374
          %v462 = vsel %vm461, %v458, -1e+09
          %463 = vst.msk [vmem:[#allocation2] sm:$0xff] %vm384, %v462
          %v464 = vld [vmem:[#allocation3] sm:$0xff]
          %v465 = vsel %vm384, %v462, -inf
          %466 = vmax.xlane.f32.xlu0 %v465
          %v467 = vpop.xlane.xlu0 %466
          %v468 = vmax.f32 %v464, %v467
          %469 = vst.msk [vmem:[#allocation3] sm:$0xff] %vm377, %v468
        $region48: #{tpu_custom_call.1} parent=39 // pred_fallthru
          _
        %p470 = scmp.ge.s32.totalorder %s30, 1
        // Predicated region
        $region49: #{tpu_custom_call.1} parent=39 // pred_check
          %p471 = pneg %p470
        $region50: #{tpu_custom_call.1} parent=39 // pred_check_branch
          %473 = sbr.rel (%p471) target = $region52
        $region51: #{tpu_custom_call.1} parent=39 // pred_region
          %v474 = vld [vmem:[%s357 + $0x8] sm:$0xff]
          %vm475 = vcmask 64512
          %v477 = vsel %vm475, %v369, 0
          %v480 = vsel %vm475, %v474, 0
          %482 = vmatprep.subr.mxu0 0.0
          %483 = vmatpush1.xpose.msra.mxu0 %v480
          %484 = vmatprep.subr.mxu0 0.0
          %485 = vmatpush1.xpose.msra.mxu0 0.0
          %486 = vmatprep.subr.mxu0 0.0
          %487 = vmatpush1.xpose.msra.mxu0 0.0
          %488 = vmatprep.subr.mxu0 0.0
          %489 = vmatpush1.xpose.msra.mxu0 0.0
          %490 = vmatprep.subr.mxu0 0.0
          %491 = vmatpush1.xpose.msra.mxu0 0.0
          %492 = vmatprep.subr.mxu0 0.0
          %493 = vmatpush1.xpose.msra.mxu0 0.0
          %494 = vmatprep.subr.mxu0 0.0
          %495 = vmatpush1.xpose.msra.mxu0 0.0
          %496 = vmatprep.subr.mxu0 0.0
          %497 = vmatpush1.xpose.msra.mxu0 0.0
          %498 = vmatprep.subr.mxu0 0.0
          %499 = vmatpush1.xpose.msra.mxu0 0.0
          %500 = vmatprep.subr.mxu0 0.0
          %501 = vmatpush1.xpose.msra.mxu0 0.0
          %502 = vmatprep.subr.mxu0 0.0
          %503 = vmatpush1.xpose.msra.mxu0 0.0
          %504 = vmatprep.subr.mxu0 0.0
          %505 = vmatpush1.xpose.msra.mxu0 0.0
          %506 = vmatprep.subr.mxu0 0.0
          %507 = vmatpush1.xpose.msra.mxu0 0.0
          %508 = vmatprep.subr.mxu0 0.0
          %509 = vmatpush1.xpose.msra.mxu0 0.0
          %510 = vmatprep.subr.mxu0 0.0
          %511 = vmatpush1.xpose.msra.mxu0 0.0
          %512 = vmatprep.subr.mxu0 0.0
          %513 = vmatpush1.xpose.msra.mxu0 0.0
          %514 = vmatprep.subr.mxu0 0.0
          %515 = vmatpush1.xpose.msra.mxu0 0.0
          %516 = vmatprep.subr.mxu0 0.0
          %517 = vmatpush1.xpose.msra.mxu0 0.0
          %518 = vmatprep.subr.mxu0 0.0
          %519 = vmatpush1.xpose.msra.mxu0 0.0
          %520 = vmatprep.subr.mxu0 0.0
          %521 = vmatpush1.xpose.msra.mxu0 0.0
          %522 = vmatprep.subr.mxu0 0.0
          %523 = vmatpush1.xpose.msra.mxu0 0.0
          %524 = vmatprep.subr.mxu0 0.0
          %525 = vmatpush1.xpose.msra.mxu0 0.0
          %526 = vmatprep.subr.mxu0 0.0
          %527 = vmatpush1.xpose.msra.mxu0 0.0
          %528 = vmatprep.subr.mxu0 0.0
          %529 = vmatpush1.xpose.msra.mxu0 0.0
          %530 = vmatprep.subr.mxu0 0.0
          %531 = vmatpush1.xpose.msra.mxu0 0.0
          %532 = vmatprep.subr.mxu0 0.0
          %533 = vmatpush1.xpose.msra.mxu0 0.0
          %534 = vmatprep.subr.mxu0 0.0
          %535 = vmatpush1.xpose.msra.mxu0 0.0
          %536 = vmatprep.subr.mxu0 0.0
          %537 = vmatpush1.xpose.msra.mxu0 0.0
          %538 = vmatprep.subr.mxu0 0.0
          %539 = vmatpush1.xpose.msra.mxu0 0.0
          %540 = vmatprep.subr.mxu0 0.0
          %541 = vmatpush1.xpose.msra.mxu0 0.0
          %542 = vmatprep.subr.mxu0 0.0
          %543 = vmatpush1.xpose.msra.mxu0 0.0
          %544 = vmatprep.subr.mxu0 0.0
          %545 = vmatpush1.xpose.msra.mxu0 0.0
          %546 = vmatprep.mubr.f32.mxu0 0.0
          %547 = vmatmul.mubr.f32.gmra.mrb[0].mxu0 %v477
          %v548 = vpop.f32.mrb[0].mxu0
          %v549 = vadd.f32 0.0, %v548
          %v550 = vpop.f32.mrb[0].mxu0
          %551 = vdwg.mxu0
          %v552 = vadd.s32 %v376, 8
          %vm553 = vcmp.le.s32.totalorder %v552, %v374
          %v554 = vsel %vm553, %v549, -1e+09
          %s555 = scalar_lea.vmem [#allocation2], 8
          %556 = vst.msk [vmem:[%s555] sm:$0xff] %vm475, %v554
          %v557 = vld [vmem:[#allocation3] sm:$0xff]
          %v558 = vsel %vm475, %v554, -inf
          %559 = vmax.xlane.f32.xlu0 %v558
          %v560 = vpop.xlane.xlu0 %559
          %v561 = vmax.f32 %v557, %v560
          %562 = vst.msk [vmem:[#allocation3] sm:$0xff] %vm377, %v561
        $region52: #{tpu_custom_call.1} parent=39 // pred_fallthru
          _
        %v563 = vld [vmem:[#allocation3] sm:$0xff]
        %v564 = vsub.f32 %v563, 1.0
        loop: start=0, step=1, limit=24
        $region53: #{tpu_custom_call.1} parent=39 // loop_pre_header
          _
        $region54: #{tpu_custom_call.1} parent=39 // loop_header
          %s566 = sphi 0, %s570
          %p567 = scmp.ge.s32.totalorder %s566, 24
          %v571 = vphi %v564, %v618
          %s572 = sphi 0.75, %s573
        $region55: #{tpu_custom_call.1} parent=39 // loop_header_branch
          %569 = sbr.rel (%p567) target = $region59
        $region56: #{tpu_custom_call.1} parent=39 // loop_body
          %s573 = smul.f32 %s572, 0.5
          %v574 = vstv %s573
          %v575 = vadd.f32 %v571, %v574
          %576 = vst.msk [vmem:[#allocation3] sm:$0xff] %vm377, 0.0
          // Predicated region
          $region60: #{tpu_custom_call.1} parent=56 // pred_check
            %p577 = pneg %p379
          $region61: #{tpu_custom_call.1} parent=56 // pred_check_branch
            %579 = sbr.rel (%p577) target = $region63
          $region62: #{tpu_custom_call.1} parent=56 // pred_region
            %v580 = vld [vmem:[#allocation2] sm:$0xff]
            %582 = vset.pattern.permute.xlu0 0
            %583 = vperm.xlu0 %582, %v575
            %v584 = vpop.permute.xlu0 %583
            %v586 = vsub.f32 %v580, %v584
            %v587 = vmax.f32 %v586, 0.0
            %v588 = vld [vmem:[#allocation3] sm:$0xff]
            %v589 = vmul.f32 %v587, %v587
            %vm590 = vcmask 64512
            %v591 = vsel %vm590, %v589, 0.0
            %592 = vadd.xlane.f32.xlu0 %v591
            %v593 = vpop.xlane.xlu0 %592
            %v594 = vadd.f32 %v588, %v593
            %595 = vst.msk [vmem:[#allocation3] sm:$0xff] %vm377, %v594
          $region63: #{tpu_custom_call.1} parent=56 // pred_fallthru
            _
          // Predicated region
          $region64: #{tpu_custom_call.1} parent=56 // pred_check
            %p596 = pneg %p470
          $region65: #{tpu_custom_call.1} parent=56 // pred_check_branch
            %598 = sbr.rel (%p596) target = $region67
          $region66: #{tpu_custom_call.1} parent=56 // pred_region
            %s599 = scalar_lea.vmem [#allocation2], 8
            %v600 = vld [vmem:[%s599] sm:$0xff]
            %602 = vset.pattern.permute.xlu0 0
            %603 = vperm.xlu0 %602, %v575
            %v604 = vpop.permute.xlu0 %603
            %v606 = vsub.f32 %v600, %v604
            %v607 = vmax.f32 %v606, 0.0
            %v608 = vld [vmem:[#allocation3] sm:$0xff]
            %v609 = vmul.f32 %v607, %v607
            %vm610 = vcmask 64512
            %v611 = vsel %vm610, %v609, 0.0
            %612 = vadd.xlane.f32.xlu0 %v611
            %v613 = vpop.xlane.xlu0 %612
            %v614 = vadd.f32 %v608, %v613
            %615 = vst.msk [vmem:[#allocation3] sm:$0xff] %vm377, %v614
          $region67: #{tpu_custom_call.1} parent=56 // pred_fallthru
            _
          %v616 = vld [vmem:[#allocation3] sm:$0xff]
          %vm617 = vcmp.ge.f32.partialorder %v616, 1.0
          %v618 = vsel %vm617, %v575, %v571
        $region57: #{tpu_custom_call.1} parent=39 // loop_footer
          %s570 = sadd.s32 1, %s566
        $region58: #{tpu_custom_call.1} parent=39 // loop_footer_branch
          %565 = sbr.rel target = $region54
        $region59: #{tpu_custom_call.1} parent=39 // loop_exit
          _
        %619 = vst.msk [vmem:[#allocation3] sm:$0xff] %vm377, 0.0
        // Predicated region
        $region68: #{tpu_custom_call.1} parent=39 // pred_check
          %p620 = pneg %p379
        $region69: #{tpu_custom_call.1} parent=39 // pred_check_branch
          %622 = sbr.rel (%p620) target = $region71
        $region70: #{tpu_custom_call.1} parent=39 // pred_region
          %v623 = vld [vmem:[#allocation2] sm:$0xff]
          %625 = vset.pattern.permute.xlu0 0
          %626 = vperm.xlu0 %625, %v571
          %v627 = vpop.permute.xlu0 %626
          %v629 = vsub.f32 %v623, %v627
          %v630 = vmax.f32 %v629, 0.0
          %v631 = vld [vmem:[#allocation3] sm:$0xff]
          %v632 = vmul.f32 %v630, %v630
          %vm633 = vcmask 64512
          %v634 = vsel %vm633, %v632, 0.0
          %635 = vadd.xlane.f32.xlu0 %v634
          %v636 = vpop.xlane.xlu0 %635
          %v637 = vadd.f32 %v631, %v636
          %638 = vst.msk [vmem:[#allocation3] sm:$0xff] %vm377, %v637
        $region71: #{tpu_custom_call.1} parent=39 // pred_fallthru
          _
        // Predicated region
        $region72: #{tpu_custom_call.1} parent=39 // pred_check
          %p639 = pneg %p470
        $region73: #{tpu_custom_call.1} parent=39 // pred_check_branch
          %641 = sbr.rel (%p639) target = $region75
        $region74: #{tpu_custom_call.1} parent=39 // pred_region
          %s642 = scalar_lea.vmem [#allocation2], 8
          %v643 = vld [vmem:[%s642] sm:$0xff]
          %645 = vset.pattern.permute.xlu0 0
          %646 = vperm.xlu0 %645, %v571
          %v647 = vpop.permute.xlu0 %646
          %v649 = vsub.f32 %v643, %v647
          %v650 = vmax.f32 %v649, 0.0
          %v651 = vld [vmem:[#allocation3] sm:$0xff]
          %v652 = vmul.f32 %v650, %v650
          %vm653 = vcmask 64512
          %v654 = vsel %vm653, %v652, 0.0
          %655 = vadd.xlane.f32.xlu0 %v654
          %v656 = vpop.xlane.xlu0 %655
          %v657 = vadd.f32 %v651, %v656
          %658 = vst.msk [vmem:[#allocation3] sm:$0xff] %vm377, %v657
        $region75: #{tpu_custom_call.1} parent=39 // pred_fallthru
          _
        %v659 = vld [vmem:[#allocation3] sm:$0xff]
        %v660 = vrcp.pop %v659
        // Predicated region
        $region76: #{tpu_custom_call.1} parent=39 // pred_check
          %p661 = pneg %p379
        $region77: #{tpu_custom_call.1} parent=39 // pred_check_branch
          %663 = sbr.rel (%p661) target = $region79
        $region78: #{tpu_custom_call.1} parent=39 // pred_region
          %v664 = vld [vmem:[#allocation2] sm:$0xff]
          %666 = vset.pattern.permute.xlu0 0
          %667 = vperm.xlu0 %666, %v571
          %v668 = vpop.permute.xlu0 %667
          %v670 = vsub.f32 %v664, %v668
          %v671 = vmax.f32 %v670, 0.0
          %v672 = vld [vmem:[%s336] sm:$0xff]
          %v673 = vmul.f32 %v671, %v671
          %675 = vset.pattern.permute.xlu0 0
          %676 = vperm.xlu0 %675, %v660
          %v677 = vpop.permute.xlu0 %676
          %v679 = vmul.f32 %v673, %v677
          %v680 = vadd.f32 %v672, %v679
          %vm681 = vcmask 64512
          %682 = vst.msk [vmem:[%s336] sm:$0xff] %vm681, %v680
        $region79: #{tpu_custom_call.1} parent=39 // pred_fallthru
          _
        // Predicated region
        $region80: #{tpu_custom_call.1} parent=39 // pred_check
          %p683 = pneg %p470
        $region81: #{tpu_custom_call.1} parent=39 // pred_check_branch
          %685 = sbr.rel (%p683) target = $region83
        $region82: #{tpu_custom_call.1} parent=39 // pred_region
          %s686 = scalar_lea.vmem [#allocation2], 8
          %v687 = vld [vmem:[%s686] sm:$0xff]
          %689 = vset.pattern.permute.xlu0 0
          %690 = vperm.xlu0 %689, %v571
          %v691 = vpop.permute.xlu0 %690
          %v693 = vsub.f32 %v687, %v691
          %v694 = vmax.f32 %v693, 0.0
          %v695 = vld [vmem:[%s336] sm:$0xff]
          %v696 = vmul.f32 %v694, %v694
          %698 = vset.pattern.permute.xlu0 0
          %699 = vperm.xlu0 %698, %v660
          %v700 = vpop.permute.xlu0 %699
          %v702 = vmul.f32 %v696, %v700
          %704 = vrot.lane.b32.xlu0 %v702, 8
          %v705 = vpop.permute.xlu0 %704
          %v707 = vadd.f32 %v695, %v705
          %vm708 = vcmask 130112
          %709 = vst.msk [vmem:[%s336] sm:$0xff] %vm708, %v707
        $region83: #{tpu_custom_call.1} parent=39 // pred_fallthru
          _
        %p710 = scmp.eq.s32.totalorder %s31, 3
        // Predicated region
        $region84: #{tpu_custom_call.1} parent=39 // pred_check
          %p711 = pneg %p710
        $region85: #{tpu_custom_call.1} parent=39 // pred_check_branch
          %713 = sbr.rel (%p711) target = $region87
        $region86: #{tpu_custom_call.1} parent=39 // pred_region
          %v714 = vld [vmem:[%s336] sm:$0xff]
          %v715 = vmul.f32 %v714, 0.25
          %vm716 = vcmask 130048
          %717 = vst.msk [vmem:[%s336] sm:$0xff] %vm716, %v715
          %v718 = vld [vmem:[%s362] sm:$0xff]
          %v719 = vld [vmem:[%s362 + $0x8] sm:$0xff]
          %v721 = vsel %vm716, %v715, 0
          %723 = vmatprep.subr.mxu0 0.0
          %724 = vmatpush1.msra.mxu0 %v718
          %725 = vmatprep.subr.mxu0 0.0
          %726 = vmatpush1.msra.mxu0 %v719
          %727 = vmatprep.subr.mxu0 0.0
          %728 = vmatpush1.msra.mxu0 0.0
          %729 = vmatprep.subr.mxu0 0.0
          %730 = vmatpush1.msra.mxu0 0.0
          %731 = vmatprep.subr.mxu0 0.0
          %732 = vmatpush1.msra.mxu0 0.0
          %733 = vmatprep.subr.mxu0 0.0
          %734 = vmatpush1.msra.mxu0 0.0
          %735 = vmatprep.subr.mxu0 0.0
          %736 = vmatpush1.msra.mxu0 0.0
          %737 = vmatprep.subr.mxu0 0.0
          %738 = vmatpush1.msra.mxu0 0.0
          %739 = vmatprep.subr.mxu0 0.0
          %740 = vmatpush1.msra.mxu0 0.0
          %741 = vmatprep.subr.mxu0 0.0
          %742 = vmatpush1.msra.mxu0 0.0
          %743 = vmatprep.subr.mxu0 0.0
          %744 = vmatpush1.msra.mxu0 0.0
          %745 = vmatprep.subr.mxu0 0.0
          %746 = vmatpush1.msra.mxu0 0.0
          %747 = vmatprep.subr.mxu0 0.0
          %748 = vmatpush1.msra.mxu0 0.0
          %749 = vmatprep.subr.mxu0 0.0
          %750 = vmatpush1.msra.mxu0 0.0
          %751 = vmatprep.subr.mxu0 0.0
          %752 = vmatpush1.msra.mxu0 0.0
          %753 = vmatprep.subr.mxu0 0.0
          %754 = vmatpush1.msra.mxu0 0.0
          %755 = vmatprep.subr.mxu0 0.0
          %756 = vmatpush1.msra.mxu0 0.0
          %757 = vmatprep.subr.mxu0 0.0
          %758 = vmatpush1.msra.mxu0 0.0
          %759 = vmatprep.subr.mxu0 0.0
          %760 = vmatpush1.msra.mxu0 0.0
          %761 = vmatprep.subr.mxu0 0.0
          %762 = vmatpush1.msra.mxu0 0.0
          %763 = vmatprep.subr.mxu0 0.0
          %764 = vmatpush1.msra.mxu0 0.0
          %765 = vmatprep.subr.mxu0 0.0
          %766 = vmatpush1.msra.mxu0 0.0
          %767 = vmatprep.subr.mxu0 0.0
          %768 = vmatpush1.msra.mxu0 0.0
          %769 = vmatprep.subr.mxu0 0.0
          %770 = vmatpush1.msra.mxu0 0.0
          %771 = vmatprep.subr.mxu0 0.0
          %772 = vmatpush1.msra.mxu0 0.0
          %773 = vmatprep.subr.mxu0 0.0
          %774 = vmatpush1.msra.mxu0 0.0
          %775 = vmatprep.subr.mxu0 0.0
          %776 = vmatpush1.msra.mxu0 0.0
          %777 = vmatprep.subr.mxu0 0.0
          %778 = vmatpush1.msra.mxu0 0.0
          %779 = vmatprep.subr.mxu0 0.0
          %780 = vmatpush1.msra.mxu0 0.0
          %781 = vmatprep.subr.mxu0 0.0
          %782 = vmatpush1.msra.mxu0 0.0
          %783 = vmatprep.subr.mxu0 0.0
          %784 = vmatpush1.msra.mxu0 0.0
          %785 = vmatprep.subr.mxu0 0.0
          %786 = vmatpush1.msra.mxu0 0.0
          %787 = vmatprep.mubr.f32.mxu0 0.0
          %788 = vmatmul.mubr.f32.gmra.mrb[0].mxu0 %v721
          %v789 = vpop.f32.mrb[0].mxu0
          %v790 = vadd.f32 0.0, %v789
          %v791 = vpop.f32.mrb[0].mxu0
          %792 = vdwg.mxu0
          %v793 = vld [vmem:[%s3] sm:$0xff]
          %v794 = vld [vmem:[%s4] sm:$0x1]
          %v796 = vlaneseq
          %v797 = vshrl.u32 %v796, 7
          %v798 = vsub.s32 0, %v797
          %v799 = vrot.slane %v794, %v798
          %vm801 = vcmask 64512
          %v803 = vsel %vm801, %v790, 0
          %805 = vmatprep.subr.mxu0 0.0
          %806 = vmatpush1.msra.mxu0 %v793
          %807 = vmatprep.subr.mxu0 0.0
          %808 = vmatpush1.msra.mxu0 0.0
          %809 = vmatprep.subr.mxu0 0.0
          %810 = vmatpush1.msra.mxu0 0.0
          %811 = vmatprep.subr.mxu0 0.0
          %812 = vmatpush1.msra.mxu0 0.0
          %813 = vmatprep.subr.mxu0 0.0
          %814 = vmatpush1.msra.mxu0 0.0
          %815 = vmatprep.subr.mxu0 0.0
          %816 = vmatpush1.msra.mxu0 0.0
          %817 = vmatprep.subr.mxu0 0.0
          %818 = vmatpush1.msra.mxu0 0.0
          %819 = vmatprep.subr.mxu0 0.0
          %820 = vmatpush1.msra.mxu0 0.0
          %821 = vmatprep.subr.mxu0 0.0
          %822 = vmatpush1.msra.mxu0 0.0
          %823 = vmatprep.subr.mxu0 0.0
          %824 = vmatpush1.msra.mxu0 0.0
          %825 = vmatprep.subr.mxu0 0.0
          %826 = vmatpush1.msra.mxu0 0.0
          %827 = vmatprep.subr.mxu0 0.0
          %828 = vmatpush1.msra.mxu0 0.0
          %829 = vmatprep.subr.mxu0 0.0
          %830 = vmatpush1.msra.mxu0 0.0
          %831 = vmatprep.subr.mxu0 0.0
          %832 = vmatpush1.msra.mxu0 0.0
          %833 = vmatprep.subr.mxu0 0.0
          %834 = vmatpush1.msra.mxu0 0.0
          %835 = vmatprep.subr.mxu0 0.0
          %836 = vmatpush1.msra.mxu0 0.0
          %837 = vmatprep.subr.mxu0 0.0
          %838 = vmatpush1.msra.mxu0 0.0
          %839 = vmatprep.subr.mxu0 0.0
          %840 = vmatpush1.msra.mxu0 0.0
          %841 = vmatprep.subr.mxu0 0.0
          %842 = vmatpush1.msra.mxu0 0.0
          %843 = vmatprep.subr.mxu0 0.0
          %844 = vmatpush1.msra.mxu0 0.0
          %845 = vmatprep.subr.mxu0 0.0
          %846 = vmatpush1.msra.mxu0 0.0
          %847 = vmatprep.subr.mxu0 0.0
          %848 = vmatpush1.msra.mxu0 0.0
          %849 = vmatprep.subr.mxu0 0.0
          %850 = vmatpush1.msra.mxu0 0.0
          %851 = vmatprep.subr.mxu0 0.0
          %852 = vmatpush1.msra.mxu0 0.0
          %853 = vmatprep.subr.mxu0 0.0
          %854 = vmatpush1.msra.mxu0 0.0
          %855 = vmatprep.subr.mxu0 0.0
          %856 = vmatpush1.msra.mxu0 0.0
          %857 = vmatprep.subr.mxu0 0.0
          %858 = vmatpush1.msra.mxu0 0.0
          %859 = vmatprep.subr.mxu0 0.0
          %860 = vmatpush1.msra.mxu0 0.0
          %861 = vmatprep.subr.mxu0 0.0
          %862 = vmatpush1.msra.mxu0 0.0
          %863 = vmatprep.subr.mxu0 0.0
          %864 = vmatpush1.msra.mxu0 0.0
          %865 = vmatprep.subr.mxu0 0.0
          %866 = vmatpush1.msra.mxu0 0.0
          %867 = vmatprep.subr.mxu0 0.0
          %868 = vmatpush1.msra.mxu0 0.0
          %869 = vmatprep.mubr.f32.mxu0 0.0
          %870 = vmatmul.mubr.f32.gmra.mrb[0].mxu0 %v803
          %v871 = vpop.f32.mrb[0].mxu0
          %v872 = vadd.f32 %v799, %v871
          %v873 = vpop.f32.mrb[0].mxu0
          %874 = vdwg.mxu0
          %vm875 = vcmask 261120
          %876 = vst.msk [vmem:[%s329] sm:$0xff] %vm875, %v872
        $region87: #{tpu_custom_call.1} parent=39 // pred_fallthru
          _
        %s877 = sand.u32 %s179, 1
        %s878 = scalar_lea.sflag [#allocation5], %s877
        %s879 = sand.u32 %s179, 1
        %s880 = smul.addr %s879, 8
        %s881 = scalar_lea.vmem [#allocation4], %s880
        %s882 = sand.u32 %s207, 1
        %s883 = scalar_lea.sflag [#allocation7], %s882
        %s884 = sand.u32 %s207, 1
        %s885 = smul.addr %s884, 8
        %s886 = scalar_lea.vmem [#allocation6], %s885
        // Predicated region
        $region88: #{tpu_custom_call.1} parent=39 // pred_check
          %p887 = pneg %p189
        $region89: #{tpu_custom_call.1} parent=39 // pred_check_branch
          %889 = sbr.rel (%p887) target = $region91
        $region90: #{tpu_custom_call.1} parent=39 // pred_region
          %s891 = ssub.s32 128, 128
          %892 = vsyncadd %s878, %s891
          %s893 = smul.addr %s29, 2
          %s894 = sadd.s32 %s30, %s893
          %s895 = smul.addr %s894, 128
          %s896 = scalar_lea.hbm %s5, %s895
          %s898 = sshll.u32 %s881, 4
          %s899 = int_to_ptr.vmem [resolvable:$true] %s898
          %901 = dma.vmem_to_hbm [thread:$0]  %s899, 128, %s896, %s878
        $region91: #{tpu_custom_call.1} parent=39 // pred_fallthru
          _
        // Predicated region
        $region92: #{tpu_custom_call.1} parent=39 // pred_check
          %p902 = pneg %p217
        $region93: #{tpu_custom_call.1} parent=39 // pred_check_branch
          %904 = sbr.rel (%p902) target = $region95
        $region94: #{tpu_custom_call.1} parent=39 // pred_region
          %s906 = ssub.s32 128, 128
          %907 = vsyncadd %s883, %s906
          %s908 = smul.addr %s29, 2
          %s909 = sadd.s32 %s30, %s908
          %s910 = smul.addr %s909, 128
          %s911 = scalar_lea.hbm %s6, %s910
          %s913 = sshll.u32 %s886, 4
          %s914 = int_to_ptr.vmem [resolvable:$true] %s913
          %916 = dma.vmem_to_hbm [thread:$0]  %s914, 128, %s911, %s883
        $region95: #{tpu_custom_call.1} parent=39 // pred_fallthru
          _
      $region40: #{tpu_custom_call.1} parent=5 // pred_fallthru
        _
      %p917 = scmp.le.s32.totalorder 2, %s19
      // Predicated region
      $region96: #{tpu_custom_call.1} parent=5 // pred_check
        %p918 = pneg %p917
      $region97: #{tpu_custom_call.1} parent=5 // pred_check_branch
        %920 = sbr.rel (%p918) target = $region99
      $region98: #{tpu_custom_call.1} parent=5 // pred_region
        %s921 = ssub.s32 %s19, 2
        // Predicated region
        $region100: #{tpu_custom_call.1} parent=98 // pred_check
          %p922 = pneg %p195
        $region101: #{tpu_custom_call.1} parent=98 // pred_check_branch
          %924 = sbr.rel (%p922) target = $region103
        $region102: #{tpu_custom_call.1} parent=98 // pred_region
          %s925 = sand.u32 %s180, 1
          %s926 = scalar_lea.sflag [#allocation5], %s925
          %s927 = sand.u32 %s180, 1
          %s928 = smul.addr %s927, 8
          %s929 = scalar_lea.vmem [#allocation4], %s928
          %930 = dma.done %s926, 128
        $region103: #{tpu_custom_call.1} parent=98 // pred_fallthru
          _
        // Predicated region
        $region104: #{tpu_custom_call.1} parent=98 // pred_check
          %p931 = pneg %p223
        $region105: #{tpu_custom_call.1} parent=98 // pred_check_branch
          %933 = sbr.rel (%p931) target = $region107
        $region106: #{tpu_custom_call.1} parent=98 // pred_region
          %s934 = sand.u32 %s208, 1
          %s935 = scalar_lea.sflag [#allocation7], %s934
          %s936 = sand.u32 %s208, 1
          %s937 = smul.addr %s936, 8
          %s938 = scalar_lea.vmem [#allocation6], %s937
          %939 = dma.done %s935, 128
        $region107: #{tpu_custom_call.1} parent=98 // pred_fallthru
          _
      $region99: #{tpu_custom_call.1} parent=5 // pred_fallthru
        _
    $region6: #{tpu_custom_call.1} parent=1 // loop_footer
      %s23 = sadd.s32 1, %s19
    $region7: #{tpu_custom_call.1} parent=1 // loop_footer_branch
      %18 = sbr.rel target = $region3
    $region8: #{tpu_custom_call.1} parent=1 // loop_exit
      _
    %940 = vsyncpa [#allocation5], 1
    %s941 = scalar_lea.sflag [#allocation5], 1
    %942 = vsyncpa %s941, 1
    %943 = vsyncpa [#allocation7], 1
    %s944 = scalar_lea.sflag [#allocation7], 1
    %945 = vsyncpa %s944, 1

</llo_original>
